<compile_context>
chip_gen: v5e
topology: v5e:2x2
jax: 0.10.0
libtpu: 0.0.40
codegen_flags: <defaults>
</compile_context>

<pallas_src>
import functools
import math

import jax
import jax.numpy as jnp
from jax.experimental import pallas as pl
from jax.experimental.pallas import tpu as pltpu

RMS_EPS = 1.1920929e-07     # torch.finfo(float32).eps — F.rms_norm default eps
NEG_INF = -1e30             # large finite negative: avoids exp(-inf - -inf) NaNs


# ----------------------------- Pallas kernels ------------------------------ #

def _matmul_kernel(x_ref, w_ref, o_ref, acc_ref):
    """Tiled matmul with f32 accumulator; grid = (M/tm, N/tn, K/tk)."""
    @pl.when(pl.program_id(2) == 0)
    def _():
        acc_ref[...] = jnp.zeros_like(acc_ref)

    acc_ref[...] += jnp.dot(x_ref[...], w_ref[...],
                            preferred_element_type=jnp.float32)

    @pl.when(pl.program_id(2) == pl.num_programs(2) - 1)
    def _():
        o_ref[...] = acc_ref[...].astype(o_ref.dtype)


def _prep_kernel(lam_ref, cos_ref, sin_ref, q_ref, k_ref, v_ref, vr_ref,
                 qrot_ref, krot_ref, vb_ref, vf_ref, *, scale):
    """Once-per-token epilogue of the QKV projection, per (row-block, head):
    RMSNorm + rotary on Q (pre-scaled by 1/sqrt(hd)) and K, lambda-mix of V.
    Emits bf16 slabs for the attention kernel plus an f32 V for the caller."""
    hd = q_ref.shape[-1]
    half = hd // 2
    cos = cos_ref[...]                              # (tm, hd//2) f32
    sin = sin_ref[...]

    def rms(a):
        a = a.astype(jnp.float32)
        ms = jnp.mean(a * a, axis=-1, keepdims=True)
        return a * jax.lax.rsqrt(ms + RMS_EPS)

    def rope(a):
        # matches torch Rotary: y1 = x1*cos + x2*sin ; y2 = -x1*sin + x2*cos
        x1 = a[:, :half]
        x2 = a[:, half:]
        return jnp.concatenate([x1 * cos + x2 * sin, x2 * cos - x1 * sin],
                               axis=-1)

    qrot_ref[...] = (rope(rms(q_ref[...])) * scale).astype(qrot_ref.dtype)
    krot_ref[...] = rope(rms(k_ref[...])).astype(krot_ref.dtype)

    vmix = (lam_ref[0] * v_ref[...].astype(jnp.float32)
            + lam_ref[1] * vr_ref[...].astype(jnp.float32))
    vf_ref[...] = vmix
    vb_ref[...] = vmix.astype(vb_ref.dtype)


def _flash_attn_kernel(q_ref, k_ref, v_ref, o_ref, m_ref, l_ref, acc_ref):
    """Per (head, q-block): stream KV blocks with online softmax.

    Q is already RMS-normed, rotated and pre-scaled; K is RMS-normed+rotated;
    all operands are bf16.  Requires tq == tk so that the diagonal block's
    mask is the purely-local lower triangle.
    """
    qi = pl.program_id(1)
    ki = pl.program_id(2)

    @pl.when(ki == 0)
    def _():
        m_ref[...] = jnp.full_like(m_ref, NEG_INF)
        l_ref[...] = jnp.zeros_like(l_ref)
        acc_ref[...] = jnp.zeros_like(acc_ref)

    def scores():
        # contract the head dim of Q and K directly (no explicit K transpose)
        return jax.lax.dot_general(
            q_ref[...], k_ref[...],
            dimension_numbers=(((1,), (1,)), ((), ())),
            preferred_element_type=jnp.float32)

    def update(s):
        m_prev = m_ref[...]
        m_new = jnp.maximum(m_prev, jnp.max(s, axis=-1, keepdims=True))
        alpha = jnp.exp(m_prev - m_new)
        p = jnp.exp(s - m_new)
        l_ref[...] = alpha * l_ref[...] + jnp.sum(p, axis=-1, keepdims=True)
        acc_ref[...] = alpha * acc_ref[...] + jnp.dot(
            p.astype(v_ref.dtype), v_ref[...],
            preferred_element_type=jnp.float32)
        m_ref[...] = m_new

    # TODO(synk): general flex_attention block_mask / score_mod is not
    # translated; a standard causal mask is assumed here.

    # strictly-below-diagonal blocks: no mask needed (fast path).
    @pl.when(ki < qi)
    def _():
        update(scores())

    # diagonal block (tq == tk): purely local lower-triangular mask.
    @pl.when(ki == qi)
    def _():
        s = scores()
        row = jax.lax.broadcasted_iota(jnp.int32, s.shape, 0)
        col = jax.lax.broadcasted_iota(jnp.int32, s.shape, 1)
        update(jnp.where(row >= col, s, NEG_INF))

    # blocks with ki > qi are fully masked: compute is skipped above and the
    # clamped K/V index_maps make their DMAs degenerate to a repeated block.

    @pl.when(ki == pl.num_programs(2) - 1)
    def _():
        o_ref[...] = (acc_ref[...] / l_ref[...]).astype(o_ref.dtype)


# ------------------------------ JAX wrapper -------------------------------- #

def _tiled_matmul(x, w, out_dtype=jnp.float32, tm=256, tn=256, tk=512):
    """x:(M,K) @ w:(K,N) with double-buffered HBM->VMEM pipelining."""
    M, K = x.shape
    K2, N = w.shape
    assert K == K2
    tm, tn, tk = min(tm, M), min(tn, N), min(tk, K)
    assert M % tm == 0 and N % tn == 0 and K % tk == 0
    return pl.pallas_call(
        _matmul_kernel,
        grid=(M // tm, N // tn, K // tk),
        out_shape=jax.ShapeDtypeStruct((M, N), out_dtype),
        in_specs=[pl.BlockSpec((tm, tk), lambda i, j, k: (i, k)),
                  pl.BlockSpec((tk, tn), lambda i, j, k: (k, j))],
        out_specs=pl.BlockSpec((tm, tn), lambda i, j, k: (i, j)),
        scratch_shapes=[pltpu.VMEM((tm, tn), jnp.float32)],
        compiler_params=pltpu.CompilerParams(
            dimension_semantics=("parallel", "parallel", "arbitrary")),
    )(x, w)


def make_params(dim, num_heads, max_seq_len=1024, seed=0):
    """Deterministic init mirroring the PyTorch module __init__.

    Weights are stored pre-transposed to (in, out) layout and pre-cast to bf16
    once; rotary cos/sin tables are precomputed once."""
    hd = dim // num_heads
    key = jax.random.PRNGKey(seed)
    kq, kk, kv = jax.random.split(key, 3)
    std = 0.5 * dim ** (-0.5)
    bound = (3.0 ** 0.5) * std
    uni = lambda k: jax.random.uniform(k, (dim, dim), jnp.float32, -bound, bound)
    wq, wk, wv = uni(kq), uni(kk), uni(kv)
    params = {
        "w_qkv": jnp.concatenate([wq, wk, wv], axis=1).astype(jnp.bfloat16),  # (D, 3D)
        "wo_t": jnp.zeros((dim, dim), jnp.bfloat16),       # o_proj zero-init
        "lambdas": jnp.array([0.5, 0.5], jnp.float32),
    }
    # Rotary tables (head_dim = hd): hd//4 nonzero freqs padded with hd//4 zeros.
    freq = (1.0 / 1024.0) ** jnp.linspace(0.0, 1.0, hd // 4, dtype=jnp.float32)
    freq = jnp.concatenate([freq, jnp.zeros((hd // 4,), jnp.float32)])
    t = jnp.arange(max_seq_len, dtype=jnp.float32)
    theta = t[:, None] * freq[None, :]                      # (max_seq_len, hd//2)
    params["cos_tab"] = jnp.cos(theta)
    params["sin_tab"] = jnp.sin(theta)
    params["num_heads"] = num_heads
    return params


def self_attention_forward(x, vr, pos_ids, params):
    """x: (1, T, D);  vr: (1, T, H, hd) or None;  pos_ids: (T,) int32.
    Returns (y, v) with y: (1, T, D), v: (1, T, H, hd) — matching torch."""
    B, T, D = x.shape
    assert B == 1, "Must use batch size = 1 (flex_attention convention)"
    H = params["num_heads"]
    hd = D // H
    # TODO(synk): for hd < 128 a head-grouped variant (several heads per grid
    # step) is needed to keep blocks lane-aligned; not implemented here.
    assert hd % 128 == 0, "head_dim must be a multiple of 128 lanes"
    x2d = x[0]

    # ---- fused QKV projection: one tiled (T,D)x(D,3D) matmul, bf16 in/out,
    #      f32 accumulation.  bf16 output halves intermediate HBM traffic.
    qkv = _tiled_matmul(x2d.astype(jnp.bfloat16), params["w_qkv"],
                        out_dtype=jnp.bfloat16)                       # (T, 3D)

    # ---- per-call rotary rows (tables precomputed once in make_params)
    cos_rows = params["cos_tab"][pos_ids]                   # (T, hd//2) f32
    sin_rows = params["sin_tab"][pos_ids]

    # ---- prepass: RMSNorm + RoPE (+ scale) on Q/K and lambda-mix of V,
    #      once per token; emits bf16 slabs consumed by attention.
    tm = min(256, T)
    assert T % tm == 0
    scale = 1.0 / math.sqrt(hd)          # flex_attention default scale

    def qk_block(off):                   # head h lives at column block off + h
        return pl.BlockSpec((tm, hd), lambda i, h, off=off: (i, off + h))

    if vr is None:
        vr_arr = qkv                     # vr defaults to v itself
        vr_spec = qk_block(2 * H)
    else:
        vr_arr = vr.reshape(T, D)        # (T,H,hd) contiguous == (T,D)
        vr_spec = pl.BlockSpec((tm, hd), lambda i, h: (i, h))

    out_blk = pl.BlockSpec((tm, hd), lambda i, h: (i, h))
    rot_spec = pl.BlockSpec((tm, hd // 2), lambda i, h: (i, 0))

    q_rot, k_rot, v_bf16, v_f32 = pl.pallas_call(
        functools.partial(_prep_kernel, scale=scale),
        grid=(T // tm, H),
        out_shape=(jax.ShapeDtypeStruct((T, D), jnp.bfloat16),   # Q rot (scaled)
                   jax.ShapeDtypeStruct((T, D), jnp.bfloat16),   # K rot
                   jax.ShapeDtypeStruct((T, D), jnp.bfloat16),   # V mix (attn)
                   jax.ShapeDtypeStruct((T, D), jnp.float32)),   # V mix (return)
        in_specs=[pl.BlockSpec(memory_space=pltpu.MemorySpace.SMEM),  # lambdas
                  rot_spec, rot_spec,                                 # cos, sin
                  qk_block(0), qk_block(H), qk_block(2 * H),          # q, k, v
                  vr_spec],
        out_specs=[out_blk, out_blk, out_blk, out_blk],
        compiler_params=pltpu.CompilerParams(
            dimension_semantics=("parallel", "arbitrary")),
    )(params["lambdas"], cos_rows, sin_rows, qkv, qkv, qkv, vr_arr)

    # ---- flash-style attention over (heads, q-blocks, kv-blocks)
    tq = tk = min(256, T)                # fills 256-deep MXU on v6e/v7x
    assert T % tq == 0

    q_spec = pl.BlockSpec((tq, hd), lambda h, qi, ki: (qi, h))
    # clamp kv block index: fully-masked blocks reuse the previous block, so
    # Pallas elides their HBM->VMEM copies (~2x K/V read reduction, causal).
    k_spec = pl.BlockSpec((tk, hd), lambda h, qi, ki: (jnp.minimum(ki, qi), h))
    v_spec = pl.BlockSpec((tk, hd), lambda h, qi, ki: (jnp.minimum(ki, qi), h))
    o_spec = pl.BlockSpec((tq, hd), lambda h, qi, ki: (qi, h))

    y2d = pl.pallas_call(
        _flash_attn_kernel,
        grid=(H, T // tq, T // tk),
        out_shape=jax.ShapeDtypeStruct((T, D), jnp.bfloat16),
        in_specs=[q_spec, k_spec, v_spec],
        out_specs=o_spec,
        scratch_shapes=[pltpu.VMEM((tq, 1), jnp.float32),    # running max m
                        pltpu.VMEM((tq, 1), jnp.float32),    # running sum l
                        pltpu.VMEM((tq, hd), jnp.float32)],  # output accumulator
        compiler_params=pltpu.CompilerParams(
            dimension_semantics=("parallel", "parallel", "arbitrary")),
    )(q_rot, k_rot, v_bf16)

    # ---- output projection (zero-initialized weight, still computed)
    o2d = _tiled_matmul(y2d, params["wo_t"])                 # (T, D) f32

    return o2d.reshape(1, T, D), v_f32.reshape(1, T, H, hd)


# ---------------------------------- main ----------------------------------- #

if __name__ == "__main__":
    T, D, H = 512, 256, 2
    hd = D // H          # 128 — lane-aligned head dim

    params = make_params(D, H, max_seq_len=1024, seed=0)

    key = jax.random.PRNGKey(0)
    kx, kvr = jax.random.split(key)
    x = jax.random.normal(kx, (1, T, D), jnp.float32)
    vr = jax.random.normal(kvr, (1, T, H, hd), jnp.float32)
    pos_ids = jnp.arange(T, dtype=jnp.int32)

    y, v_mixed = self_attention_forward(x, vr, pos_ids, params)
    y = jax.block_until_ready(y)
    v_mixed = jax.block_until_ready(v_mixed)

    assert y.shape == (1, T, D) and v_mixed.shape == (1, T, H, hd)
    assert bool(jnp.all(jnp.isfinite(y))) and bool(jnp.all(jnp.isfinite(v_mixed)))
    # o_proj weight is zero-initialized in the reference module -> y must be 0.
    assert bool(jnp.all(y == 0.0))

    print("KERNEL_OK")
</pallas_src>

<mosaic_0001>
module attributes {stable_mosaic.version = 11 : i64} {
  func.func @_matmul_kernel(%arg0: i32, %arg1: i32, %arg2: i32, %arg3: memref<256x256xbf16, #tpu.memory_space<vmem>>, %arg4: memref<256x256xbf16, #tpu.memory_space<vmem>>, %arg5: memref<256x256xbf16, #tpu.memory_space<vmem>>, %arg6: memref<256x256xf32, #tpu.memory_space<vmem>>) attributes {dimension_semantics = [#tpu.dimension_semantics<parallel>, #tpu.dimension_semantics<parallel>, #tpu.dimension_semantics<arbitrary>], iteration_bounds = array<i64: 2, 3, 1>, scalar_prefetch = 0 : i64, scratch_operands = 1 : i64, tpu.core_type = #tpu.core_type<tc>, window_params = [{transform_indices = @transform_0, window_bounds = array<i64: 256, 256>}, {transform_indices = @transform_1, window_bounds = array<i64: 256, 256>}, {transform_indices = @transform_2, window_bounds = array<i64: 256, 256>}]} {
    %c0_i32 = arith.constant 0 : i32
    %0 = arith.cmpi eq, %arg2, %c0_i32 : i32
    %1 = arith.extui %0 : i1 to i32
    %c0_i32_0 = arith.constant 0 : i32
    %2 = arith.cmpi ne, %1, %c0_i32_0 : i32
    scf.if %2 {
      %cst_10 = arith.constant 0.000000e+00 : f32
      %12 = vector.broadcast %cst_10 : f32 to vector<256x256xf32>
      %c0_11 = arith.constant 0 : index
      %c0_12 = arith.constant 0 : index
      %13 = vector.load %arg6[%c0_11, %c0_12] : memref<256x256xf32, #tpu.memory_space<vmem>>, vector<256x256xf32>
      tpu.vector_store %arg6[%c0_11, %c0_12], %12 {strides = array<i32>} : memref<256x256xf32, #tpu.memory_space<vmem>>, vector<256x256xf32>,
    } else {
    }
    %c0 = arith.constant 0 : index
    %c0_1 = arith.constant 0 : index
    %3 = vector.load %arg6[%c0, %c0_1] : memref<256x256xf32, #tpu.memory_space<vmem>>, vector<256x256xf32>
    %c0_2 = arith.constant 0 : index
    %c0_3 = arith.constant 0 : index
    %4 = vector.load %arg3[%c0_2, %c0_3] : memref<256x256xbf16, #tpu.memory_space<vmem>>, vector<256x256xbf16>
    %c0_4 = arith.constant 0 : index
    %c0_5 = arith.constant 0 : index
    %5 = vector.load %arg4[%c0_4, %c0_5] : memref<256x256xbf16, #tpu.memory_space<vmem>>, vector<256x256xbf16>
    %cst = arith.constant dense<0.000000e+00> : vector<256x256xf32>
    %6 = tpu.matmul %4, %5, %cst {dimension_numbers = #tpu.dot_dimension_numbers<[1], [0], [0], [1], [0, 0, 1, 1], [], []>} : vector<256x256xbf16>, vector<256x256xbf16>, vector<256x256xf32> -> vector<256x256xf32>
    %7 = arith.addf %3, %6 : vector<256x256xf32>
    %c0_6 = arith.constant 0 : index
    %c0_7 = arith.constant 0 : index
    %8 = vector.load %arg6[%c0_6, %c0_7] : memref<256x256xf32, #tpu.memory_space<vmem>>, vector<256x256xf32>
    tpu.vector_store %arg6[%c0_6, %c0_7], %7 {strides = array<i32>} : memref<256x256xf32, #tpu.memory_space<vmem>>, vector<256x256xf32>,
    %c0_i32_8 = arith.constant 0 : i32
    %9 = arith.cmpi eq, %arg2, %c0_i32_8 : i32
    %10 = arith.extui %9 : i1 to i32
    %c0_i32_9 = arith.constant 0 : i32
    %11 = arith.cmpi ne, %10, %c0_i32_9 : i32
    scf.if %11 {
      %c0_10 = arith.constant 0 : index
      %c0_11 = arith.constant 0 : index
      %12 = vector.load %arg6[%c0_10, %c0_11] : memref<256x256xf32, #tpu.memory_space<vmem>>, vector<256x256xf32>
      %13 = arith.truncf %12 : vector<256x256xf32> to vector<256x256xbf16>
      %c0_12 = arith.constant 0 : index
      %c0_13 = arith.constant 0 : index
      %14 = vector.load %arg5[%c0_12, %c0_13] : memref<256x256xbf16, #tpu.memory_space<vmem>>, vector<256x256xbf16>
      tpu.vector_store %arg5[%c0_12, %c0_13], %13 {strides = array<i32>} : memref<256x256xbf16, #tpu.memory_space<vmem>>, vector<256x256xbf16>,
    } else {
    }
    return
  }
  func.func @transform_0(%arg0: i32, %arg1: i32, %arg2: i32) -> (i32, i32) {
    %c0_i32 = arith.constant 0 : i32
    return %arg0, %arg2 : i32, i32
  }
  func.func @transform_1(%arg0: i32, %arg1: i32, %arg2: i32) -> (i32, i32) {
    %c0_i32 = arith.constant 0 : i32
    return %arg2, %arg1 : i32, i32
  }
  func.func @transform_2(%arg0: i32, %arg1: i32, %arg2: i32) -> (i32, i32) {
    %c0_i32 = arith.constant 0 : i32
    return %arg0, %arg1 : i32, i32
  }
}

</mosaic_0001>

<llo_original>
// kernel: tpu_custom_call.1
$region0: #{tpu_custom_call.1}
  #allocation0 [shape = 'u32[]', space=smem, size = 0x4, offset = 0x4, fixed_abs, tag = 'smem constant byte address 0x4 - core index']
  #allocation1 [shape = 'u32[72,128]{1,0:T(1,128)}', space=vmem, size = 0x9000, scoped, tag = 'internal scratch']
  #allocation2 [shape = 'f32[256,256]{1,0:T(8,128)}', space=vmem, size = 0x40000, scoped, tag = 'scratch operand']
  %s0 = inlined_call_operand.hbm [shape: bf16[512,256], index: 0, kind: input, shape index: {}]
  %s1 = inlined_call_operand.hbm [shape: bf16[256,768], index: 1, kind: input, shape index: {}]
  %s2 = inlined_call_operand.hbm [shape: bf16[512,768], index: 2, kind: output, shape index: {}]
  %s3 = sld [smem:[#allocation0]]
  $region57: #{tpu_custom_call.1} parent=0
    _
  %s5 = ssub.s32 1, %s3
  %s6 = scalar_select 0, %s5, %s3
  $region1: #{tpu_custom_call.1} parent=0
    #allocation3 [shape = 'u8[262144]{0}', space=vmem, size = 0x40000, scoped, tag = 'input window, operand 0']
    #allocation4 [shape = 's32[2]{0}', space=sflag, size = 0x8, scoped, tag = 'scoped memory for tpu_custom_call.1']
    #allocation5 [shape = 's32[2]{0}', space=sflag, size = 0x8, scoped, tag = 'scoped memory for tpu_custom_call.1']
    #allocation6 [shape = 'u8[262144]{0}', space=vmem, size = 0x40000, scoped, tag = 'input window, operand 1']
    #allocation7 [shape = 's32[2]{0}', space=sflag, size = 0x8, scoped, tag = 'scoped memory for tpu_custom_call.1']
    #allocation8 [shape = 'u8[262144]{0}', space=vmem, size = 0x40000, scoped, tag = 'output window, operand 0']
    %7 = vsyncpa [#allocation4], 0
    %s8 = scalar_lea.sflag [#allocation4], 1
    %9 = vsyncpa %s8, 0
    %10 = vsyncpa [#allocation7], 0
    %s11 = scalar_lea.sflag [#allocation7], 1
    %12 = vsyncpa %s11, 0
    %13 = vsyncpa [#allocation5], 0
    %s14 = scalar_lea.sflag [#allocation5], 1
    %15 = vsyncpa %s14, 0
    loop: start=0, step=1, limit=8
    $region2: #{tpu_custom_call.1} parent=1 // loop_pre_header
      _
    $region3: #{tpu_custom_call.1} parent=1 // loop_header
      %s17 = sphi 0, %s21
      %p18 = scmp.ge.s32.totalorder %s17, 8
      %s24 = sphi 0, %s43
      %s25 = sphi 0, %s39
      %s26 = sphi 0, %s35
      %s27 = sphi 0, %s24
      %s28 = sphi 0, %s25
      %s29 = sphi 0, %s26
      %s30 = sphi 0, %s27
      %s31 = sphi 0, %s28
      %s32 = sphi 0, %s29
      %s48 = sphi 0, %s50
      %s51 = sphi 0, %s48
      %s52 = sphi 0, %s51
      %s68 = sphi 0, %s52
      %s76 = sphi 0, %s78
      %s79 = sphi 0, %s76
      %s80 = sphi 0, %s79
      %s96 = sphi 0, %s80
      %s104 = sphi 0, %s106
      %s107 = sphi 0, %s104
      %s108 = sphi 0, %s107
      %s124 = sphi 0, %s108
    $region4: #{tpu_custom_call.1} parent=1 // loop_header_branch
      %20 = sbr.rel (%p18) target = $region8
    $region5: #{tpu_custom_call.1} parent=1 // loop_body
      %s22 = ssub.s32 %s17, 1
      %s23 = ssub.s32 %s17, 2
      %s33 = sadd.s32 1, %s26
      %p34 = scmp.ge.s32.totalorder %s33, 1
      %s35 = scalar_select %p34, 0, %s33
      %s36 = sadd.s32 1, %s25
      %s37 = scalar_select %p34, %s36, %s25
      %p38 = scmp.ge.s32.totalorder %s37, 3
      %s39 = scalar_select %p38, 0, %s37
      %s40 = sadd.s32 1, %s24
      %s41 = scalar_select %p38, %s40, %s24
      %p42 = scmp.ge.s32.totalorder %s41, 2
      %s43 = scalar_select %p42, 0, %s41
      %s44 = ssub.s32 %s24, %s43
      %s45 = ssub.s32 %s26, %s35
      %s46 = sor.u32 %s44, %s45
      %p47 = scmp.eq.s32.totalorder %s46, 0
      %s49 = sadd.s32 %s48, 1
      %s50 = scalar_select %p47, %s48, %s49
      %p53 = pneg %p47
      %p54 = scmp.eq.s32.totalorder %s17, 5
      %p55 = por %p53, %p54
      %p56 = scmp.ne.s32.totalorder %s48, %s51
      %p57 = scmp.eq.s32.totalorder %s17, 0
      %p58 = por %p56, %p57
      %p59 = scmp.ne.s32.totalorder %s48, %s51
      %p60 = scmp.eq.s32.totalorder %s22, 5
      %p61 = por %p59, %p60
      %p62 = scmp.ne.s32.totalorder %s51, %s52
      %p63 = scmp.eq.s32.totalorder %s22, 0
      %p64 = por %p62, %p63
      %p65 = scmp.ne.s32.totalorder %s51, %s52
      %p66 = scmp.eq.s32.totalorder %s23, 5
      %p67 = por %p65, %p66
      %p69 = scmp.ne.s32.totalorder %s52, %s68
      %p70 = scmp.eq.s32.totalorder %s23, 0
      %p71 = por %p69, %p70
      %s72 = ssub.s32 %s26, %s35
      %s73 = ssub.s32 %s25, %s39
      %s74 = sor.u32 %s72, %s73
      %p75 = scmp.eq.s32.totalorder %s74, 0
      %s77 = sadd.s32 %s76, 1
      %s78 = scalar_select %p75, %s76, %s77
      %p81 = pneg %p75
      %p82 = scmp.eq.s32.totalorder %s17, 5
      %p83 = por %p81, %p82
      %p84 = scmp.ne.s32.totalorder %s76, %s79
      %p85 = scmp.eq.s32.totalorder %s17, 0
      %p86 = por %p84, %p85
      %p87 = scmp.ne.s32.totalorder %s76, %s79
      %p88 = scmp.eq.s32.totalorder %s22, 5
      %p89 = por %p87, %p88
      %p90 = scmp.ne.s32.totalorder %s79, %s80
      %p91 = scmp.eq.s32.totalorder %s22, 0
      %p92 = por %p90, %p91
      %p93 = scmp.ne.s32.totalorder %s79, %s80
      %p94 = scmp.eq.s32.totalorder %s23, 5
      %p95 = por %p93, %p94
      %p97 = scmp.ne.s32.totalorder %s80, %s96
      %p98 = scmp.eq.s32.totalorder %s23, 0
      %p99 = por %p97, %p98
      %s100 = ssub.s32 %s24, %s43
      %s101 = ssub.s32 %s25, %s39
      %s102 = sor.u32 %s100, %s101
      %p103 = scmp.eq.s32.totalorder %s102, 0
      %s105 = sadd.s32 %s104, 1
      %s106 = scalar_select %p103, %s104, %s105
      %p109 = pneg %p103
      %p110 = scmp.eq.s32.totalorder %s17, 5
      %p111 = por %p109, %p110
      %p112 = scmp.ne.s32.totalorder %s104, %s107
      %p113 = scmp.eq.s32.totalorder %s17, 0
      %p114 = por %p112, %p113
      %p115 = scmp.ne.s32.totalorder %s104, %s107
      %p116 = scmp.eq.s32.totalorder %s22, 5
      %p117 = por %p115, %p116
      %p118 = scmp.ne.s32.totalorder %s107, %s108
      %p119 = scmp.eq.s32.totalorder %s22, 0
      %p120 = por %p118, %p119
      %p121 = scmp.ne.s32.totalorder %s107, %s108
      %p122 = scmp.eq.s32.totalorder %s23, 5
      %p123 = por %p121, %p122
      %p125 = scmp.ne.s32.totalorder %s108, %s124
      %p126 = scmp.eq.s32.totalorder %s23, 0
      %p127 = por %p125, %p126
      %p128 = scmp.le.s32.totalorder 1, %s17
      %p129 = scmp.lt.s32.totalorder %s17, 7
      %p130 = pnand %p128, %p129
      %p131 = pneg %p130
      // Predicated region
      $region9: #{tpu_custom_call.1} parent=5 // pred_check
        _
      $region10: #{tpu_custom_call.1} parent=5 // pred_check_branch
        %133 = sbr.rel (%p130) target = $region12
      $region11: #{tpu_custom_call.1} parent=5 // pred_region
        %s134 = ssub.s32 %s17, 1
      $region12: #{tpu_custom_call.1} parent=5 // pred_fallthru
        _
      %p135 = scmp.lt.s32.totalorder %s17, 6
      // Predicated region
      $region13: #{tpu_custom_call.1} parent=5 // pred_check
        %p136 = pneg %p135
      $region14: #{tpu_custom_call.1} parent=5 // pred_check_branch
        %138 = sbr.rel (%p136) target = $region16
      $region15: #{tpu_custom_call.1} parent=5 // pred_region
        // Predicated region
        $region17: #{tpu_custom_call.1} parent=15 // pred_check
          %p139 = pneg %p58
        $region18: #{tpu_custom_call.1} parent=15 // pred_check_branch
          %141 = sbr.rel (%p139) target = $region20
        $region19: #{tpu_custom_call.1} parent=15 // pred_region
          %s142 = sand.u32 %s48, 1
          %s143 = scalar_lea.sflag [#allocation4], %s142
          %s144 = sand.u32 %s48, 1
          %s145 = smul.addr %s144, 256
          %s146 = scalar_lea.vmem [#allocation3], %s145
          %s147 = smul.u32 32, %s24
          %s148 = smul.u32 2, %s26
          %150 = vsyncadd %s143, 0
          %s151 = smul.addr %s147, 2
          %s152 = sadd.s32 %s148, %s151
          %s153 = smul.addr %s152, 4
          %s154 = scalar_lea.hbm %s0, %s153
          %s155 = sshll.u32 %s154, 4
          %s156 = int_to_ptr.hbm [resolvable:$true] %s155
          %s157 = sshll.u32 %s146, 4
          %s158 = int_to_ptr.vmem [resolvable:$true] %s157
          %163 = dma.hbm_to_vmem [thread:$0]  %s156, 4096, %s158, %s143, 128, 128, 8
        $region20: #{tpu_custom_call.1} parent=15 // pred_fallthru
          _
        // Predicated region
        $region21: #{tpu_custom_call.1} parent=15 // pred_check
          %p164 = pneg %p86
        $region22: #{tpu_custom_call.1} parent=15 // pred_check_branch
          %166 = sbr.rel (%p164) target = $region24
        $region23: #{tpu_custom_call.1} parent=15 // pred_region
          %s167 = sand.u32 %s76, 1
          %s168 = scalar_lea.sflag [#allocation7], %s167
          %s169 = sand.u32 %s76, 1
          %s170 = smul.addr %s169, 256
          %s171 = scalar_lea.vmem [#allocation6], %s170
          %s172 = smul.u32 32, %s26
          %s173 = smul.u32 2, %s25
          %175 = vsyncadd %s168, 0
          %s176 = smul.addr %s172, 6
          %s177 = sadd.s32 %s173, %s176
          %s178 = smul.addr %s177, 4
          %s179 = scalar_lea.hbm %s1, %s178
          %s180 = sshll.u32 %s179, 4
          %s181 = int_to_ptr.hbm [resolvable:$true] %s180
          %s182 = sshll.u32 %s171, 4
          %s183 = int_to_ptr.vmem [resolvable:$true] %s182
          %188 = dma.hbm_to_vmem [thread:$0]  %s181, 4096, %s183, %s168, 384, 128, 8
        $region24: #{tpu_custom_call.1} parent=15 // pred_fallthru
          _
      $region16: #{tpu_custom_call.1} parent=5 // pred_fallthru
        _
      %p189 = scmp.le.s32.totalorder 1, %s17
      %p190 = scmp.lt.s32.totalorder %s17, 7
      %p191 = pnand %p189, %p190
      %p192 = pneg %p191
      // Predicated region
      $region25: #{tpu_custom_call.1} parent=5 // pred_check
        _
      $region26: #{tpu_custom_call.1} parent=5 // pred_check_branch
        %194 = sbr.rel (%p191) target = $region28
      $region27: #{tpu_custom_call.1} parent=5 // pred_region
        %s195 = ssub.s32 %s17, 1
        %s196 = sand.u32 %s51, 1
        %s197 = scalar_lea.sflag [#allocation4], %s196
        %s198 = sand.u32 %s51, 1
        %s199 = smul.addr %s198, 256
        %s200 = scalar_lea.vmem [#allocation3], %s199
        // Predicated region
        $region29: #{tpu_custom_call.1} parent=27 // pred_check
          %p201 = pneg %p64
        $region30: #{tpu_custom_call.1} parent=27 // pred_check_branch
          %203 = sbr.rel (%p201) target = $region32
        $region31: #{tpu_custom_call.1} parent=27 // pred_region
          %205 = dma.done %s197, 4096
        $region32: #{tpu_custom_call.1} parent=27 // pred_fallthru
          _
        %s206 = sand.u32 %s79, 1
        %s207 = scalar_lea.sflag [#allocation7], %s206
        %s208 = sand.u32 %s79, 1
        %s209 = smul.addr %s208, 256
        %s210 = scalar_lea.vmem [#allocation6], %s209
        // Predicated region
        $region33: #{tpu_custom_call.1} parent=27 // pred_check
          %p211 = pneg %p92
        $region34: #{tpu_custom_call.1} parent=27 // pred_check_branch
          %213 = sbr.rel (%p211) target = $region36
        $region35: #{tpu_custom_call.1} parent=27 // pred_region
          %215 = dma.done %s207, 4096
        $region36: #{tpu_custom_call.1} parent=27 // pred_fallthru
          _
        %s216 = sand.u32 %s51, 1
        %s217 = scalar_lea.sflag [#allocation4], %s216
        %s218 = sand.u32 %s51, 1
        %s219 = smul.addr %s218, 256
        %s220 = scalar_lea.vmem [#allocation3], %s219
        %p221 = pneg %p64
        %p222 = pneg %p61
        %s223 = sand.u32 %s79, 1
        %s224 = scalar_lea.sflag [#allocation7], %s223
        %s225 = sand.u32 %s79, 1
        %s226 = smul.addr %s225, 256
        %s227 = scalar_lea.vmem [#allocation6], %s226
        %p228 = pneg %p92
        %p229 = pneg %p89
        %p230 = pneg %p120
        %p231 = pneg %p117
        %s232 = sand.u32 %s107, 1
        %s233 = scalar_lea.sflag [#allocation5], %s232
        %s234 = sand.u32 %s107, 1
        %s235 = smul.addr %s234, 256
        %s236 = scalar_lea.vmem [#allocation8], %s235
        %s237 = smul.u32 32, %s27
        %s238 = smul.u32 2, %s29
        %s239 = smul.u32 32, %s29
        %s240 = smul.u32 2, %s28
        %s241 = smul.u32 32, %s27
        %s242 = smul.u32 2, %s28
        %p243 = scmp.eq.s32.totalorder %s29, 0
        // Predicated region
        $region37: #{tpu_custom_call.1} parent=27 // pred_check
          %p244 = pneg %p243
        $region38: #{tpu_custom_call.1} parent=27 // pred_check_branch
          %246 = sbr.rel (%p244) target = $region40
        $region39: #{tpu_custom_call.1} parent=27 // pred_region
          %247 = vst [vmem:[#allocation2] sm:$0xff] 0.0
          %248 = vst [vmem:[#allocation2 + $0x8] sm:$0xff] 0.0
          %249 = vst [vmem:[#allocation2 + $0x10] sm:$0xff] 0.0
          %250 = vst [vmem:[#allocation2 + $0x18] sm:$0xff] 0.0
          %251 = vst [vmem:[#allocation2 + $0x20] sm:$0xff] 0.0
          %252 = vst [vmem:[#allocation2 + $0x28] sm:$0xff] 0.0
          %253 = vst [vmem:[#allocation2 + $0x30] sm:$0xff] 0.0
          %254 = vst [vmem:[#allocation2 + $0x38] sm:$0xff] 0.0
          %255 = vst [vmem:[#allocation2 + $0x40] sm:$0xff] 0.0
          %256 = vst [vmem:[#allocation2 + $0x48] sm:$0xff] 0.0
          %257 = vst [vmem:[#allocation2 + $0x50] sm:$0xff] 0.0
          %258 = vst [vmem:[#allocation2 + $0x58] sm:$0xff] 0.0
          %259 = vst [vmem:[#allocation2 + $0x60] sm:$0xff] 0.0
          %260 = vst [vmem:[#allocation2 + $0x68] sm:$0xff] 0.0
          %261 = vst [vmem:[#allocation2 + $0x70] sm:$0xff] 0.0
          %262 = vst [vmem:[#allocation2 + $0x78] sm:$0xff] 0.0
          %263 = vst [vmem:[#allocation2 + $0x80] sm:$0xff] 0.0
          %264 = vst [vmem:[#allocation2 + $0x88] sm:$0xff] 0.0
          %265 = vst [vmem:[#allocation2 + $0x90] sm:$0xff] 0.0
          %266 = vst [vmem:[#allocation2 + $0x98] sm:$0xff] 0.0
          %267 = vst [vmem:[#allocation2 + $0xa0] sm:$0xff] 0.0
          %268 = vst [vmem:[#allocation2 + $0xa8] sm:$0xff] 0.0
          %269 = vst [vmem:[#allocation2 + $0xb0] sm:$0xff] 0.0
          %270 = vst [vmem:[#allocation2 + $0xb8] sm:$0xff] 0.0
          %271 = vst [vmem:[#allocation2 + $0xc0] sm:$0xff] 0.0
          %272 = vst [vmem:[#allocation2 + $0xc8] sm:$0xff] 0.0
          %273 = vst [vmem:[#allocation2 + $0xd0] sm:$0xff] 0.0
          %274 = vst [vmem:[#allocation2 + $0xd8] sm:$0xff] 0.0
          %275 = vst [vmem:[#allocation2 + $0xe0] sm:$0xff] 0.0
          %276 = vst [vmem:[#allocation2 + $0xe8] sm:$0xff] 0.0
          %277 = vst [vmem:[#allocation2 + $0xf0] sm:$0xff] 0.0
          %278 = vst [vmem:[#allocation2 + $0xf8] sm:$0xff] 0.0
          %279 = vst [vmem:[#allocation2 + $0x100] sm:$0xff] 0.0
          %280 = vst [vmem:[#allocation2 + $0x108] sm:$0xff] 0.0
          %281 = vst [vmem:[#allocation2 + $0x110] sm:$0xff] 0.0
          %282 = vst [vmem:[#allocation2 + $0x118] sm:$0xff] 0.0
          %283 = vst [vmem:[#allocation2 + $0x120] sm:$0xff] 0.0
          %284 = vst [vmem:[#allocation2 + $0x128] sm:$0xff] 0.0
          %285 = vst [vmem:[#allocation2 + $0x130] sm:$0xff] 0.0
          %286 = vst [vmem:[#allocation2 + $0x138] sm:$0xff] 0.0
          %287 = vst [vmem:[#allocation2 + $0x140] sm:$0xff] 0.0
          %288 = vst [vmem:[#allocation2 + $0x148] sm:$0xff] 0.0
          %289 = vst [vmem:[#allocation2 + $0x150] sm:$0xff] 0.0
          %290 = vst [vmem:[#allocation2 + $0x158] sm:$0xff] 0.0
          %291 = vst [vmem:[#allocation2 + $0x160] sm:$0xff] 0.0
          %292 = vst [vmem:[#allocation2 + $0x168] sm:$0xff] 0.0
          %293 = vst [vmem:[#allocation2 + $0x170] sm:$0xff] 0.0
          %294 = vst [vmem:[#allocation2 + $0x178] sm:$0xff] 0.0
          %295 = vst [vmem:[#allocation2 + $0x180] sm:$0xff] 0.0
          %296 = vst [vmem:[#allocation2 + $0x188] sm:$0xff] 0.0
          %297 = vst [vmem:[#allocation2 + $0x190] sm:$0xff] 0.0
          %298 = vst [vmem:[#allocation2 + $0x198] sm:$0xff] 0.0
          %299 = vst [vmem:[#allocation2 + $0x1a0] sm:$0xff] 0.0
          %300 = vst [vmem:[#allocation2 + $0x1a8] sm:$0xff] 0.0
          %301 = vst [vmem:[#allocation2 + $0x1b0] sm:$0xff] 0.0
          %302 = vst [vmem:[#allocation2 + $0x1b8] sm:$0xff] 0.0
          %303 = vst [vmem:[#allocation2 + $0x1c0] sm:$0xff] 0.0
          %304 = vst [vmem:[#allocation2 + $0x1c8] sm:$0xff] 0.0
          %305 = vst [vmem:[#allocation2 + $0x1d0] sm:$0xff] 0.0
          %306 = vst [vmem:[#allocation2 + $0x1d8] sm:$0xff] 0.0
          %307 = vst [vmem:[#allocation2 + $0x1e0] sm:$0xff] 0.0
          %308 = vst [vmem:[#allocation2 + $0x1e8] sm:$0xff] 0.0
          %309 = vst [vmem:[#allocation2 + $0x1f0] sm:$0xff] 0.0
          %310 = vst [vmem:[#allocation2 + $0x1f8] sm:$0xff] 0.0
        $region40: #{tpu_custom_call.1} parent=27 // pred_fallthru
          _
        %v311 = vld [vmem:[#allocation2] sm:$0xff]
        %v312 = vld [vmem:[#allocation2 + $0x8] sm:$0xff]
        %v313 = vld [vmem:[#allocation2 + $0x10] sm:$0xff]
        %v314 = vld [vmem:[#allocation2 + $0x18] sm:$0xff]
        %v315 = vld [vmem:[#allocation2 + $0x20] sm:$0xff]
        %v316 = vld [vmem:[#allocation2 + $0x28] sm:$0xff]
        %v317 = vld [vmem:[#allocation2 + $0x30] sm:$0xff]
        %v318 = vld [vmem:[#allocation2 + $0x38] sm:$0xff]
        %v319 = vld [vmem:[#allocation2 + $0x40] sm:$0xff]
        %v320 = vld [vmem:[#allocation2 + $0x48] sm:$0xff]
        %v321 = vld [vmem:[#allocation2 + $0x50] sm:$0xff]
        %v322 = vld [vmem:[#allocation2 + $0x58] sm:$0xff]
        %v323 = vld [vmem:[#allocation2 + $0x60] sm:$0xff]
        %v324 = vld [vmem:[#allocation2 + $0x68] sm:$0xff]
        %v325 = vld [vmem:[#allocation2 + $0x70] sm:$0xff]
        %v326 = vld [vmem:[#allocation2 + $0x78] sm:$0xff]
        %v327 = vld [vmem:[#allocation2 + $0x80] sm:$0xff]
        %v328 = vld [vmem:[#allocation2 + $0x88] sm:$0xff]
        %v329 = vld [vmem:[#allocation2 + $0x90] sm:$0xff]
        %v330 = vld [vmem:[#allocation2 + $0x98] sm:$0xff]
        %v331 = vld [vmem:[#allocation2 + $0xa0] sm:$0xff]
        %v332 = vld [vmem:[#allocation2 + $0xa8] sm:$0xff]
        %v333 = vld [vmem:[#allocation2 + $0xb0] sm:$0xff]
        %v334 = vld [vmem:[#allocation2 + $0xb8] sm:$0xff]
        %v335 = vld [vmem:[#allocation2 + $0xc0] sm:$0xff]
        %v336 = vld [vmem:[#allocation2 + $0xc8] sm:$0xff]
        %v337 = vld [vmem:[#allocation2 + $0xd0] sm:$0xff]
        %v338 = vld [vmem:[#allocation2 + $0xd8] sm:$0xff]
        %v339 = vld [vmem:[#allocation2 + $0xe0] sm:$0xff]
        %v340 = vld [vmem:[#allocation2 + $0xe8] sm:$0xff]
        %v341 = vld [vmem:[#allocation2 + $0xf0] sm:$0xff]
        %v342 = vld [vmem:[#allocation2 + $0xf8] sm:$0xff]
        %v343 = vld [vmem:[#allocation2 + $0x100] sm:$0xff]
        %v344 = vld [vmem:[#allocation2 + $0x108] sm:$0xff]
        %v345 = vld [vmem:[#allocation2 + $0x110] sm:$0xff]
        %v346 = vld [vmem:[#allocation2 + $0x118] sm:$0xff]
        %v347 = vld [vmem:[#allocation2 + $0x120] sm:$0xff]
        %v348 = vld [vmem:[#allocation2 + $0x128] sm:$0xff]
        %v349 = vld [vmem:[#allocation2 + $0x130] sm:$0xff]
        %v350 = vld [vmem:[#allocation2 + $0x138] sm:$0xff]
        %v351 = vld [vmem:[#allocation2 + $0x140] sm:$0xff]
        %v352 = vld [vmem:[#allocation2 + $0x148] sm:$0xff]
        %v353 = vld [vmem:[#allocation2 + $0x150] sm:$0xff]
        %v354 = vld [vmem:[#allocation2 + $0x158] sm:$0xff]
        %v355 = vld [vmem:[#allocation2 + $0x160] sm:$0xff]
        %v356 = vld [vmem:[#allocation2 + $0x168] sm:$0xff]
        %v357 = vld [vmem:[#allocation2 + $0x170] sm:$0xff]
        %v358 = vld [vmem:[#allocation2 + $0x178] sm:$0xff]
        %v359 = vld [vmem:[#allocation2 + $0x180] sm:$0xff]
        %v360 = vld [vmem:[#allocation2 + $0x188] sm:$0xff]
        %v361 = vld [vmem:[#allocation2 + $0x190] sm:$0xff]
        %v362 = vld [vmem:[#allocation2 + $0x198] sm:$0xff]
        %v363 = vld [vmem:[#allocation2 + $0x1a0] sm:$0xff]
        %v364 = vld [vmem:[#allocation2 + $0x1a8] sm:$0xff]
        %v365 = vld [vmem:[#allocation2 + $0x1b0] sm:$0xff]
        %v366 = vld [vmem:[#allocation2 + $0x1b8] sm:$0xff]
        %v367 = vld [vmem:[#allocation2 + $0x1c0] sm:$0xff]
        %v368 = vld [vmem:[#allocation2 + $0x1c8] sm:$0xff]
        %v369 = vld [vmem:[#allocation2 + $0x1d0] sm:$0xff]
        %v370 = vld [vmem:[#allocation2 + $0x1d8] sm:$0xff]
        %v371 = vld [vmem:[#allocation2 + $0x1e0] sm:$0xff]
        %v372 = vld [vmem:[#allocation2 + $0x1e8] sm:$0xff]
        %v373 = vld [vmem:[#allocation2 + $0x1f0] sm:$0xff]
        %v374 = vld [vmem:[#allocation2 + $0x1f8] sm:$0xff]
        %v375 = vld [vmem:[%s200] sm:$0xff]
        %v376 = vld [vmem:[%s200 + $0x8] sm:$0xff]
        %v377 = vld [vmem:[%s200 + $0x10] sm:$0xff]
        %v378 = vld [vmem:[%s200 + $0x18] sm:$0xff]
        %v379 = vld [vmem:[%s200 + $0x20] sm:$0xff]
        %v380 = vld [vmem:[%s200 + $0x28] sm:$0xff]
        %v381 = vld [vmem:[%s200 + $0x30] sm:$0xff]
        %v382 = vld [vmem:[%s200 + $0x38] sm:$0xff]
        %v383 = vld [vmem:[%s200 + $0x40] sm:$0xff]
        %v384 = vld [vmem:[%s200 + $0x48] sm:$0xff]
        %v385 = vld [vmem:[%s200 + $0x50] sm:$0xff]
        %v386 = vld [vmem:[%s200 + $0x58] sm:$0xff]
        %v387 = vld [vmem:[%s200 + $0x60] sm:$0xff]
        %v388 = vld [vmem:[%s200 + $0x68] sm:$0xff]
        %v389 = vld [vmem:[%s200 + $0x70] sm:$0xff]
        %v390 = vld [vmem:[%s200 + $0x78] sm:$0xff]
        %v391 = vld [vmem:[%s200 + $0x80] sm:$0xff]
        %v392 = vld [vmem:[%s200 + $0x88] sm:$0xff]
        %v393 = vld [vmem:[%s200 + $0x90] sm:$0xff]
        %v394 = vld [vmem:[%s200 + $0x98] sm:$0xff]
        %v395 = vld [vmem:[%s200 + $0xa0] sm:$0xff]
        %v396 = vld [vmem:[%s200 + $0xa8] sm:$0xff]
        %v397 = vld [vmem:[%s200 + $0xb0] sm:$0xff]
        %v398 = vld [vmem:[%s200 + $0xb8] sm:$0xff]
        %v399 = vld [vmem:[%s200 + $0xc0] sm:$0xff]
        %v400 = vld [vmem:[%s200 + $0xc8] sm:$0xff]
        %v401 = vld [vmem:[%s200 + $0xd0] sm:$0xff]
        %v402 = vld [vmem:[%s200 + $0xd8] sm:$0xff]
        %v403 = vld [vmem:[%s200 + $0xe0] sm:$0xff]
        %v404 = vld [vmem:[%s200 + $0xe8] sm:$0xff]
        %v405 = vld [vmem:[%s200 + $0xf0] sm:$0xff]
        %v406 = vld [vmem:[%s200 + $0xf8] sm:$0xff]
        %v407 = vld [vmem:[%s210] sm:$0xff]
        %v408 = vld [vmem:[%s210 + $0x8] sm:$0xff]
        %v409 = vld [vmem:[%s210 + $0x10] sm:$0xff]
        %v410 = vld [vmem:[%s210 + $0x18] sm:$0xff]
        %v411 = vld [vmem:[%s210 + $0x20] sm:$0xff]
        %v412 = vld [vmem:[%s210 + $0x28] sm:$0xff]
        %v413 = vld [vmem:[%s210 + $0x30] sm:$0xff]
        %v414 = vld [vmem:[%s210 + $0x38] sm:$0xff]
        %v415 = vld [vmem:[%s210 + $0x40] sm:$0xff]
        %v416 = vld [vmem:[%s210 + $0x48] sm:$0xff]
        %v417 = vld [vmem:[%s210 + $0x50] sm:$0xff]
        %v418 = vld [vmem:[%s210 + $0x58] sm:$0xff]
        %v419 = vld [vmem:[%s210 + $0x60] sm:$0xff]
        %v420 = vld [vmem:[%s210 + $0x68] sm:$0xff]
        %v421 = vld [vmem:[%s210 + $0x70] sm:$0xff]
        %v422 = vld [vmem:[%s210 + $0x78] sm:$0xff]
        %v423 = vld [vmem:[%s210 + $0x80] sm:$0xff]
        %v424 = vld [vmem:[%s210 + $0x88] sm:$0xff]
        %v425 = vld [vmem:[%s210 + $0x90] sm:$0xff]
        %v426 = vld [vmem:[%s210 + $0x98] sm:$0xff]
        %v427 = vld [vmem:[%s210 + $0xa0] sm:$0xff]
        %v428 = vld [vmem:[%s210 + $0xa8] sm:$0xff]
        %v429 = vld [vmem:[%s210 + $0xb0] sm:$0xff]
        %v430 = vld [vmem:[%s210 + $0xb8] sm:$0xff]
        %v431 = vld [vmem:[%s210 + $0xc0] sm:$0xff]
        %v432 = vld [vmem:[%s210 + $0xc8] sm:$0xff]
        %v433 = vld [vmem:[%s210 + $0xd0] sm:$0xff]
        %v434 = vld [vmem:[%s210 + $0xd8] sm:$0xff]
        %v435 = vld [vmem:[%s210 + $0xe0] sm:$0xff]
        %v436 = vld [vmem:[%s210 + $0xe8] sm:$0xff]
        %v437 = vld [vmem:[%s210 + $0xf0] sm:$0xff]
        %v438 = vld [vmem:[%s210 + $0xf8] sm:$0xff]
        %v471 = vunpack.c.l.b16 %v375
        %v472 = vunpack.c.h.b16 %v375
        %v473 = vunpack.c.l.b16 %v376
        %v474 = vunpack.c.h.b16 %v376
        %v475 = vunpack.c.l.b16 %v377
        %v476 = vunpack.c.h.b16 %v377
        %v477 = vunpack.c.l.b16 %v378
        %v478 = vunpack.c.h.b16 %v378
        %v479 = vunpack.c.l.b16 %v379
        %v480 = vunpack.c.h.b16 %v379
        %v481 = vunpack.c.l.b16 %v380
        %v482 = vunpack.c.h.b16 %v380
        %v483 = vunpack.c.l.b16 %v381
        %v484 = vunpack.c.h.b16 %v381
        %v485 = vunpack.c.l.b16 %v382
        %v486 = vunpack.c.h.b16 %v382
        %v487 = vunpack.c.l.b16 %v383
        %v488 = vunpack.c.h.b16 %v383
        %v489 = vunpack.c.l.b16 %v384
        %v490 = vunpack.c.h.b16 %v384
        %v491 = vunpack.c.l.b16 %v385
        %v492 = vunpack.c.h.b16 %v385
        %v493 = vunpack.c.l.b16 %v386
        %v494 = vunpack.c.h.b16 %v386
        %v495 = vunpack.c.l.b16 %v387
        %v496 = vunpack.c.h.b16 %v387
        %v497 = vunpack.c.l.b16 %v388
        %v498 = vunpack.c.h.b16 %v388
        %v499 = vunpack.c.l.b16 %v389
        %v500 = vunpack.c.h.b16 %v389
        %v501 = vunpack.c.l.b16 %v390
        %v502 = vunpack.c.h.b16 %v390
        %v503 = vunpack.c.l.b16 %v391
        %v504 = vunpack.c.h.b16 %v391
        %v505 = vunpack.c.l.b16 %v392
        %v506 = vunpack.c.h.b16 %v392
        %v507 = vunpack.c.l.b16 %v393
        %v508 = vunpack.c.h.b16 %v393
        %v509 = vunpack.c.l.b16 %v394
        %v510 = vunpack.c.h.b16 %v394
        %v511 = vunpack.c.l.b16 %v395
        %v512 = vunpack.c.h.b16 %v395
        %v513 = vunpack.c.l.b16 %v396
        %v514 = vunpack.c.h.b16 %v396
        %v515 = vunpack.c.l.b16 %v397
        %v516 = vunpack.c.h.b16 %v397
        %v517 = vunpack.c.l.b16 %v398
        %v518 = vunpack.c.h.b16 %v398
        %v519 = vunpack.c.l.b16 %v399
        %v520 = vunpack.c.h.b16 %v399
        %v521 = vunpack.c.l.b16 %v400
        %v522 = vunpack.c.h.b16 %v400
        %v523 = vunpack.c.l.b16 %v401
        %v524 = vunpack.c.h.b16 %v401
        %v525 = vunpack.c.l.b16 %v402
        %v526 = vunpack.c.h.b16 %v402
        %v527 = vunpack.c.l.b16 %v403
        %v528 = vunpack.c.h.b16 %v403
        %v529 = vunpack.c.l.b16 %v404
        %v530 = vunpack.c.h.b16 %v404
        %v531 = vunpack.c.l.b16 %v405
        %v532 = vunpack.c.h.b16 %v405
        %v533 = vunpack.c.l.b16 %v406
        %v534 = vunpack.c.h.b16 %v406
        %v535 = vpack.c.b16 %v473, %v471
        %v536 = vpack.c.b16 %v474, %v472
        %v537 = vpack.c.b16 %v477, %v475
        %v538 = vpack.c.b16 %v478, %v476
        %v539 = vpack.c.b16 %v481, %v479
        %v540 = vpack.c.b16 %v482, %v480
        %v541 = vpack.c.b16 %v485, %v483
        %v542 = vpack.c.b16 %v486, %v484
        %v543 = vpack.c.b16 %v489, %v487
        %v544 = vpack.c.b16 %v490, %v488
        %v545 = vpack.c.b16 %v493, %v491
        %v546 = vpack.c.b16 %v494, %v492
        %v547 = vpack.c.b16 %v497, %v495
        %v548 = vpack.c.b16 %v498, %v496
        %v549 = vpack.c.b16 %v501, %v499
        %v550 = vpack.c.b16 %v502, %v500
        %v551 = vpack.c.b16 %v505, %v503
        %v552 = vpack.c.b16 %v506, %v504
        %v553 = vpack.c.b16 %v509, %v507
        %v554 = vpack.c.b16 %v510, %v508
        %v555 = vpack.c.b16 %v513, %v511
        %v556 = vpack.c.b16 %v514, %v512
        %v557 = vpack.c.b16 %v517, %v515
        %v558 = vpack.c.b16 %v518, %v516
        %v559 = vpack.c.b16 %v521, %v519
        %v560 = vpack.c.b16 %v522, %v520
        %v561 = vpack.c.b16 %v525, %v523
        %v562 = vpack.c.b16 %v526, %v524
        %v563 = vpack.c.b16 %v529, %v527
        %v564 = vpack.c.b16 %v530, %v528
        %v565 = vpack.c.b16 %v533, %v531
        %v566 = vpack.c.b16 %v534, %v532
        %v631 = vunpack.c.l.b16 %v407
        %v632 = vunpack.c.h.b16 %v407
        %v633 = vunpack.c.l.b16 %v408
        %v634 = vunpack.c.h.b16 %v408
        %v635 = vunpack.c.l.b16 %v409
        %v636 = vunpack.c.h.b16 %v409
        %v637 = vunpack.c.l.b16 %v410
        %v638 = vunpack.c.h.b16 %v410
        %v639 = vunpack.c.l.b16 %v411
        %v640 = vunpack.c.h.b16 %v411
        %v641 = vunpack.c.l.b16 %v412
        %v642 = vunpack.c.h.b16 %v412
        %v643 = vunpack.c.l.b16 %v413
        %v644 = vunpack.c.h.b16 %v413
        %v645 = vunpack.c.l.b16 %v414
        %v646 = vunpack.c.h.b16 %v414
        %v647 = vunpack.c.l.b16 %v415
        %v648 = vunpack.c.h.b16 %v415
        %v649 = vunpack.c.l.b16 %v416
        %v650 = vunpack.c.h.b16 %v416
        %v651 = vunpack.c.l.b16 %v417
        %v652 = vunpack.c.h.b16 %v417
        %v653 = vunpack.c.l.b16 %v418
        %v654 = vunpack.c.h.b16 %v418
        %v655 = vunpack.c.l.b16 %v419
        %v656 = vunpack.c.h.b16 %v419
        %v657 = vunpack.c.l.b16 %v420
        %v658 = vunpack.c.h.b16 %v420
        %v659 = vunpack.c.l.b16 %v421
        %v660 = vunpack.c.h.b16 %v421
        %v661 = vunpack.c.l.b16 %v422
        %v662 = vunpack.c.h.b16 %v422
        %v663 = vunpack.c.l.b16 %v423
        %v664 = vunpack.c.h.b16 %v423
        %v665 = vunpack.c.l.b16 %v424
        %v666 = vunpack.c.h.b16 %v424
        %v667 = vunpack.c.l.b16 %v425
        %v668 = vunpack.c.h.b16 %v425
        %v669 = vunpack.c.l.b16 %v426
        %v670 = vunpack.c.h.b16 %v426
        %v671 = vunpack.c.l.b16 %v427
        %v672 = vunpack.c.h.b16 %v427
        %v673 = vunpack.c.l.b16 %v428
        %v674 = vunpack.c.h.b16 %v428
        %v675 = vunpack.c.l.b16 %v429
        %v676 = vunpack.c.h.b16 %v429
        %v677 = vunpack.c.l.b16 %v430
        %v678 = vunpack.c.h.b16 %v430
        %v679 = vunpack.c.l.b16 %v431
        %v680 = vunpack.c.h.b16 %v431
        %v681 = vunpack.c.l.b16 %v432
        %v682 = vunpack.c.h.b16 %v432
        %v683 = vunpack.c.l.b16 %v433
        %v684 = vunpack.c.h.b16 %v433
        %v685 = vunpack.c.l.b16 %v434
        %v686 = vunpack.c.h.b16 %v434
        %v687 = vunpack.c.l.b16 %v435
        %v688 = vunpack.c.h.b16 %v435
        %v689 = vunpack.c.l.b16 %v436
        %v690 = vunpack.c.h.b16 %v436
        %v691 = vunpack.c.l.b16 %v437
        %v692 = vunpack.c.h.b16 %v437
        %v693 = vunpack.c.l.b16 %v438
        %v694 = vunpack.c.h.b16 %v438
        %v695 = vpack.c.b16 %v633, %v631
        %v696 = vpack.c.b16 %v634, %v632
        %v697 = vpack.c.b16 %v637, %v635
        %v698 = vpack.c.b16 %v638, %v636
        %v699 = vpack.c.b16 %v641, %v639
        %v700 = vpack.c.b16 %v642, %v640
        %v701 = vpack.c.b16 %v645, %v643
        %v702 = vpack.c.b16 %v646, %v644
        %v703 = vpack.c.b16 %v649, %v647
        %v704 = vpack.c.b16 %v650, %v648
        %v705 = vpack.c.b16 %v653, %v651
        %v706 = vpack.c.b16 %v654, %v652
        %v707 = vpack.c.b16 %v657, %v655
        %v708 = vpack.c.b16 %v658, %v656
        %v709 = vpack.c.b16 %v661, %v659
        %v710 = vpack.c.b16 %v662, %v660
        %v711 = vpack.c.b16 %v665, %v663
        %v712 = vpack.c.b16 %v666, %v664
        %v713 = vpack.c.b16 %v669, %v667
        %v714 = vpack.c.b16 %v670, %v668
        %v715 = vpack.c.b16 %v673, %v671
        %v716 = vpack.c.b16 %v674, %v672
        %v717 = vpack.c.b16 %v677, %v675
        %v718 = vpack.c.b16 %v678, %v676
        %v719 = vpack.c.b16 %v681, %v679
        %v720 = vpack.c.b16 %v682, %v680
        %v721 = vpack.c.b16 %v685, %v683
        %v722 = vpack.c.b16 %v686, %v684
        %v723 = vpack.c.b16 %v689, %v687
        %v724 = vpack.c.b16 %v690, %v688
        %v725 = vpack.c.b16 %v693, %v691
        %v726 = vpack.c.b16 %v694, %v692
        %759 = vmatpush.bf16.msra.mxu0 %v709
        %760 = vmatpush.bf16.msra.mxu0 %v707
        %761 = vmatpush.bf16.msra.mxu0 %v705
        %762 = vmatpush.bf16.msra.mxu0 %v703
        %763 = vmatpush.bf16.msra.mxu0 %v701
        %764 = vmatpush.bf16.msra.mxu0 %v699
        %765 = vmatpush.bf16.msra.mxu0 %v697
        %766 = vmatpush.bf16.msra.mxu0 %v695
        %767 = vmatmul.bf16.gmra.mxu0 %v535
        %v768 = vpop.f32.mrf.mxu0
        %v769 = vadd.f32 0.0, %v768
        %v770 = vpop.f32.mrf.mxu0
        %v771 = vadd.f32 0.0, %v770
        %772 = vmatmul.bf16.gmra.mxu0 %v537
        %v773 = vpop.f32.mrf.mxu0
        %v774 = vadd.f32 0.0, %v773
        %v775 = vpop.f32.mrf.mxu0
        %v776 = vadd.f32 0.0, %v775
        %777 = vmatmul.bf16.gmra.mxu0 %v539
        %v778 = vpop.f32.mrf.mxu0
        %v779 = vadd.f32 0.0, %v778
        %v780 = vpop.f32.mrf.mxu0
        %v781 = vadd.f32 0.0, %v780
        %782 = vmatmul.bf16.gmra.mxu0 %v541
        %v783 = vpop.f32.mrf.mxu0
        %v784 = vadd.f32 0.0, %v783
        %v785 = vpop.f32.mrf.mxu0
        %v786 = vadd.f32 0.0, %v785
        %787 = vmatmul.bf16.gmra.mxu0 %v543
        %v788 = vpop.f32.mrf.mxu0
        %v789 = vadd.f32 0.0, %v788
        %v790 = vpop.f32.mrf.mxu0
        %v791 = vadd.f32 0.0, %v790
        %792 = vmatmul.bf16.gmra.mxu0 %v545
        %v793 = vpop.f32.mrf.mxu0
        %v794 = vadd.f32 0.0, %v793
        %v795 = vpop.f32.mrf.mxu0
        %v796 = vadd.f32 0.0, %v795
        %797 = vmatmul.bf16.gmra.mxu0 %v547
        %v798 = vpop.f32.mrf.mxu0
        %v799 = vadd.f32 0.0, %v798
        %v800 = vpop.f32.mrf.mxu0
        %v801 = vadd.f32 0.0, %v800
        %802 = vmatmul.bf16.gmra.mxu0 %v549
        %v803 = vpop.f32.mrf.mxu0
        %v804 = vadd.f32 0.0, %v803
        %v805 = vpop.f32.mrf.mxu0
        %v806 = vadd.f32 0.0, %v805
        %807 = vmatmul.bf16.gmra.mxu0 %v551
        %v808 = vpop.f32.mrf.mxu0
        %v809 = vadd.f32 0.0, %v808
        %v810 = vpop.f32.mrf.mxu0
        %v811 = vadd.f32 0.0, %v810
        %812 = vmatmul.bf16.gmra.mxu0 %v553
        %v813 = vpop.f32.mrf.mxu0
        %v814 = vadd.f32 0.0, %v813
        %v815 = vpop.f32.mrf.mxu0
        %v816 = vadd.f32 0.0, %v815
        %817 = vmatmul.bf16.gmra.mxu0 %v555
        %v818 = vpop.f32.mrf.mxu0
        %v819 = vadd.f32 0.0, %v818
        %v820 = vpop.f32.mrf.mxu0
        %v821 = vadd.f32 0.0, %v820
        %822 = vmatmul.bf16.gmra.mxu0 %v557
        %v823 = vpop.f32.mrf.mxu0
        %v824 = vadd.f32 0.0, %v823
        %v825 = vpop.f32.mrf.mxu0
        %v826 = vadd.f32 0.0, %v825
        %827 = vmatmul.bf16.gmra.mxu0 %v559
        %v828 = vpop.f32.mrf.mxu0
        %v829 = vadd.f32 0.0, %v828
        %v830 = vpop.f32.mrf.mxu0
        %v831 = vadd.f32 0.0, %v830
        %832 = vmatmul.bf16.gmra.mxu0 %v561
        %v833 = vpop.f32.mrf.mxu0
        %v834 = vadd.f32 0.0, %v833
        %v835 = vpop.f32.mrf.mxu0
        %v836 = vadd.f32 0.0, %v835
        %837 = vmatmul.bf16.gmra.mxu0 %v563
        %v838 = vpop.f32.mrf.mxu0
        %v839 = vadd.f32 0.0, %v838
        %v840 = vpop.f32.mrf.mxu0
        %v841 = vadd.f32 0.0, %v840
        %842 = vmatmul.bf16.gmra.mxu0 %v565
        %v843 = vpop.f32.mrf.mxu0
        %v844 = vadd.f32 0.0, %v843
        %v845 = vpop.f32.mrf.mxu0
        %v846 = vadd.f32 0.0, %v845
        %847 = vdwg.mxu0
        %848 = vmatpush.bf16.msra.mxu0 %v725
        %849 = vmatpush.bf16.msra.mxu0 %v723
        %850 = vmatpush.bf16.msra.mxu0 %v721
        %851 = vmatpush.bf16.msra.mxu0 %v719
        %852 = vmatpush.bf16.msra.mxu0 %v717
        %853 = vmatpush.bf16.msra.mxu0 %v715
        %854 = vmatpush.bf16.msra.mxu0 %v713
        %855 = vmatpush.bf16.msra.mxu0 %v711
        %856 = vmatmul.bf16.gmra.mxu0 %v536
        %v857 = vpop.f32.mrf.mxu0
        %v858 = vadd.f32 %v769, %v857
        %v859 = vpop.f32.mrf.mxu0
        %v860 = vadd.f32 %v771, %v859
        %861 = vmatmul.bf16.gmra.mxu0 %v538
        %v862 = vpop.f32.mrf.mxu0
        %v863 = vadd.f32 %v774, %v862
        %v864 = vpop.f32.mrf.mxu0
        %v865 = vadd.f32 %v776, %v864
        %866 = vmatmul.bf16.gmra.mxu0 %v540
        %v867 = vpop.f32.mrf.mxu0
        %v868 = vadd.f32 %v779, %v867
        %v869 = vpop.f32.mrf.mxu0
        %v870 = vadd.f32 %v781, %v869
        %871 = vmatmul.bf16.gmra.mxu0 %v542
        %v872 = vpop.f32.mrf.mxu0
        %v873 = vadd.f32 %v784, %v872
        %v874 = vpop.f32.mrf.mxu0
        %v875 = vadd.f32 %v786, %v874
        %876 = vmatmul.bf16.gmra.mxu0 %v544
        %v877 = vpop.f32.mrf.mxu0
        %v878 = vadd.f32 %v789, %v877
        %v879 = vpop.f32.mrf.mxu0
        %v880 = vadd.f32 %v791, %v879
        %881 = vmatmul.bf16.gmra.mxu0 %v546
        %v882 = vpop.f32.mrf.mxu0
        %v883 = vadd.f32 %v794, %v882
        %v884 = vpop.f32.mrf.mxu0
        %v885 = vadd.f32 %v796, %v884
        %886 = vmatmul.bf16.gmra.mxu0 %v548
        %v887 = vpop.f32.mrf.mxu0
        %v888 = vadd.f32 %v799, %v887
        %v889 = vpop.f32.mrf.mxu0
        %v890 = vadd.f32 %v801, %v889
        %891 = vmatmul.bf16.gmra.mxu0 %v550
        %v892 = vpop.f32.mrf.mxu0
        %v893 = vadd.f32 %v804, %v892
        %v894 = vpop.f32.mrf.mxu0
        %v895 = vadd.f32 %v806, %v894
        %896 = vmatmul.bf16.gmra.mxu0 %v552
        %v897 = vpop.f32.mrf.mxu0
        %v898 = vadd.f32 %v809, %v897
        %v899 = vpop.f32.mrf.mxu0
        %v900 = vadd.f32 %v811, %v899
        %901 = vmatmul.bf16.gmra.mxu0 %v554
        %v902 = vpop.f32.mrf.mxu0
        %v903 = vadd.f32 %v814, %v902
        %v904 = vpop.f32.mrf.mxu0
        %v905 = vadd.f32 %v816, %v904
        %906 = vmatmul.bf16.gmra.mxu0 %v556
        %v907 = vpop.f32.mrf.mxu0
        %v908 = vadd.f32 %v819, %v907
        %v909 = vpop.f32.mrf.mxu0
        %v910 = vadd.f32 %v821, %v909
        %911 = vmatmul.bf16.gmra.mxu0 %v558
        %v912 = vpop.f32.mrf.mxu0
        %v913 = vadd.f32 %v824, %v912
        %v914 = vpop.f32.mrf.mxu0
        %v915 = vadd.f32 %v826, %v914
        %916 = vmatmul.bf16.gmra.mxu0 %v560
        %v917 = vpop.f32.mrf.mxu0
        %v918 = vadd.f32 %v829, %v917
        %v919 = vpop.f32.mrf.mxu0
        %v920 = vadd.f32 %v831, %v919
        %921 = vmatmul.bf16.gmra.mxu0 %v562
        %v922 = vpop.f32.mrf.mxu0
        %v923 = vadd.f32 %v834, %v922
        %v924 = vpop.f32.mrf.mxu0
        %v925 = vadd.f32 %v836, %v924
        %926 = vmatmul.bf16.gmra.mxu0 %v564
        %v927 = vpop.f32.mrf.mxu0
        %v928 = vadd.f32 %v839, %v927
        %v929 = vpop.f32.mrf.mxu0
        %v930 = vadd.f32 %v841, %v929
        %931 = vmatmul.bf16.gmra.mxu0 %v566
        %v932 = vpop.f32.mrf.mxu0
        %v933 = vadd.f32 %v844, %v932
        %v934 = vpop.f32.mrf.mxu0
        %v935 = vadd.f32 %v846, %v934
        %936 = vdwg.mxu0
        %937 = vmatpush.bf16.msra.mxu0 %v710
        %938 = vmatpush.bf16.msra.mxu0 %v708
        %939 = vmatpush.bf16.msra.mxu0 %v706
        %940 = vmatpush.bf16.msra.mxu0 %v704
        %941 = vmatpush.bf16.msra.mxu0 %v702
        %942 = vmatpush.bf16.msra.mxu0 %v700
        %943 = vmatpush.bf16.msra.mxu0 %v698
        %944 = vmatpush.bf16.msra.mxu0 %v696
        %945 = vmatmul.bf16.gmra.mxu0 %v535
        %v946 = vpop.f32.mrf.mxu0
        %v947 = vadd.f32 0.0, %v946
        %v948 = vpop.f32.mrf.mxu0
        %v949 = vadd.f32 0.0, %v948
        %950 = vmatmul.bf16.gmra.mxu0 %v537
        %v951 = vpop.f32.mrf.mxu0
        %v952 = vadd.f32 0.0, %v951
        %v953 = vpop.f32.mrf.mxu0
        %v954 = vadd.f32 0.0, %v953
        %955 = vmatmul.bf16.gmra.mxu0 %v539
        %v956 = vpop.f32.mrf.mxu0
        %v957 = vadd.f32 0.0, %v956
        %v958 = vpop.f32.mrf.mxu0
        %v959 = vadd.f32 0.0, %v958
        %960 = vmatmul.bf16.gmra.mxu0 %v541
        %v961 = vpop.f32.mrf.mxu0
        %v962 = vadd.f32 0.0, %v961
        %v963 = vpop.f32.mrf.mxu0
        %v964 = vadd.f32 0.0, %v963
        %965 = vmatmul.bf16.gmra.mxu0 %v543
        %v966 = vpop.f32.mrf.mxu0
        %v967 = vadd.f32 0.0, %v966
        %v968 = vpop.f32.mrf.mxu0
        %v969 = vadd.f32 0.0, %v968
        %970 = vmatmul.bf16.gmra.mxu0 %v545
        %v971 = vpop.f32.mrf.mxu0
        %v972 = vadd.f32 0.0, %v971
        %v973 = vpop.f32.mrf.mxu0
        %v974 = vadd.f32 0.0, %v973
        %975 = vmatmul.bf16.gmra.mxu0 %v547
        %v976 = vpop.f32.mrf.mxu0
        %v977 = vadd.f32 0.0, %v976
        %v978 = vpop.f32.mrf.mxu0
        %v979 = vadd.f32 0.0, %v978
        %980 = vmatmul.bf16.gmra.mxu0 %v549
        %v981 = vpop.f32.mrf.mxu0
        %v982 = vadd.f32 0.0, %v981
        %v983 = vpop.f32.mrf.mxu0
        %v984 = vadd.f32 0.0, %v983
        %985 = vmatmul.bf16.gmra.mxu0 %v551
        %v986 = vpop.f32.mrf.mxu0
        %v987 = vadd.f32 0.0, %v986
        %v988 = vpop.f32.mrf.mxu0
        %v989 = vadd.f32 0.0, %v988
        %990 = vmatmul.bf16.gmra.mxu0 %v553
        %v991 = vpop.f32.mrf.mxu0
        %v992 = vadd.f32 0.0, %v991
        %v993 = vpop.f32.mrf.mxu0
        %v994 = vadd.f32 0.0, %v993
        %995 = vmatmul.bf16.gmra.mxu0 %v555
        %v996 = vpop.f32.mrf.mxu0
        %v997 = vadd.f32 0.0, %v996
        %v998 = vpop.f32.mrf.mxu0
        %v999 = vadd.f32 0.0, %v998
        %1000 = vmatmul.bf16.gmra.mxu0 %v557
        %v1001 = vpop.f32.mrf.mxu0
        %v1002 = vadd.f32 0.0, %v1001
        %v1003 = vpop.f32.mrf.mxu0
        %v1004 = vadd.f32 0.0, %v1003
        %1005 = vmatmul.bf16.gmra.mxu0 %v559
        %v1006 = vpop.f32.mrf.mxu0
        %v1007 = vadd.f32 0.0, %v1006
        %v1008 = vpop.f32.mrf.mxu0
        %v1009 = vadd.f32 0.0, %v1008
        %1010 = vmatmul.bf16.gmra.mxu0 %v561
        %v1011 = vpop.f32.mrf.mxu0
        %v1012 = vadd.f32 0.0, %v1011
        %v1013 = vpop.f32.mrf.mxu0
        %v1014 = vadd.f32 0.0, %v1013
        %1015 = vmatmul.bf16.gmra.mxu0 %v563
        %v1016 = vpop.f32.mrf.mxu0
        %v1017 = vadd.f32 0.0, %v1016
        %v1018 = vpop.f32.mrf.mxu0
        %v1019 = vadd.f32 0.0, %v1018
        %1020 = vmatmul.bf16.gmra.mxu0 %v565
        %v1021 = vpop.f32.mrf.mxu0
        %v1022 = vadd.f32 0.0, %v1021
        %v1023 = vpop.f32.mrf.mxu0
        %v1024 = vadd.f32 0.0, %v1023
        %1025 = vdwg.mxu0
        %1026 = vmatpush.bf16.msra.mxu0 %v726
        %1027 = vmatpush.bf16.msra.mxu0 %v724
        %1028 = vmatpush.bf16.msra.mxu0 %v722
        %1029 = vmatpush.bf16.msra.mxu0 %v720
        %1030 = vmatpush.bf16.msra.mxu0 %v718
        %1031 = vmatpush.bf16.msra.mxu0 %v716
        %1032 = vmatpush.bf16.msra.mxu0 %v714
        %1033 = vmatpush.bf16.msra.mxu0 %v712
        %1034 = vmatmul.bf16.gmra.mxu0 %v536
        %v1035 = vpop.f32.mrf.mxu0
        %v1036 = vadd.f32 %v947, %v1035
        %v1037 = vpop.f32.mrf.mxu0
        %v1038 = vadd.f32 %v949, %v1037
        %1039 = vmatmul.bf16.gmra.mxu0 %v538
        %v1040 = vpop.f32.mrf.mxu0
        %v1041 = vadd.f32 %v952, %v1040
        %v1042 = vpop.f32.mrf.mxu0
        %v1043 = vadd.f32 %v954, %v1042
        %1044 = vmatmul.bf16.gmra.mxu0 %v540
        %v1045 = vpop.f32.mrf.mxu0
        %v1046 = vadd.f32 %v957, %v1045
        %v1047 = vpop.f32.mrf.mxu0
        %v1048 = vadd.f32 %v959, %v1047
        %1049 = vmatmul.bf16.gmra.mxu0 %v542
        %v1050 = vpop.f32.mrf.mxu0
        %v1051 = vadd.f32 %v962, %v1050
        %v1052 = vpop.f32.mrf.mxu0
        %v1053 = vadd.f32 %v964, %v1052
        %1054 = vmatmul.bf16.gmra.mxu0 %v544
        %v1055 = vpop.f32.mrf.mxu0
        %v1056 = vadd.f32 %v967, %v1055
        %v1057 = vpop.f32.mrf.mxu0
        %v1058 = vadd.f32 %v969, %v1057
        %1059 = vmatmul.bf16.gmra.mxu0 %v546
        %v1060 = vpop.f32.mrf.mxu0
        %v1061 = vadd.f32 %v972, %v1060
        %v1062 = vpop.f32.mrf.mxu0
        %v1063 = vadd.f32 %v974, %v1062
        %1064 = vmatmul.bf16.gmra.mxu0 %v548
        %v1065 = vpop.f32.mrf.mxu0
        %v1066 = vadd.f32 %v977, %v1065
        %v1067 = vpop.f32.mrf.mxu0
        %v1068 = vadd.f32 %v979, %v1067
        %1069 = vmatmul.bf16.gmra.mxu0 %v550
        %v1070 = vpop.f32.mrf.mxu0
        %v1071 = vadd.f32 %v982, %v1070
        %v1072 = vpop.f32.mrf.mxu0
        %v1073 = vadd.f32 %v984, %v1072
        %1074 = vmatmul.bf16.gmra.mxu0 %v552
        %v1075 = vpop.f32.mrf.mxu0
        %v1076 = vadd.f32 %v987, %v1075
        %v1077 = vpop.f32.mrf.mxu0
        %v1078 = vadd.f32 %v989, %v1077
        %1079 = vmatmul.bf16.gmra.mxu0 %v554
        %v1080 = vpop.f32.mrf.mxu0
        %v1081 = vadd.f32 %v992, %v1080
        %v1082 = vpop.f32.mrf.mxu0
        %v1083 = vadd.f32 %v994, %v1082
        %1084 = vmatmul.bf16.gmra.mxu0 %v556
        %v1085 = vpop.f32.mrf.mxu0
        %v1086 = vadd.f32 %v997, %v1085
        %v1087 = vpop.f32.mrf.mxu0
        %v1088 = vadd.f32 %v999, %v1087
        %1089 = vmatmul.bf16.gmra.mxu0 %v558
        %v1090 = vpop.f32.mrf.mxu0
        %v1091 = vadd.f32 %v1002, %v1090
        %v1092 = vpop.f32.mrf.mxu0
        %v1093 = vadd.f32 %v1004, %v1092
        %1094 = vmatmul.bf16.gmra.mxu0 %v560
        %v1095 = vpop.f32.mrf.mxu0
        %v1096 = vadd.f32 %v1007, %v1095
        %v1097 = vpop.f32.mrf.mxu0
        %v1098 = vadd.f32 %v1009, %v1097
        %1099 = vmatmul.bf16.gmra.mxu0 %v562
        %v1100 = vpop.f32.mrf.mxu0
        %v1101 = vadd.f32 %v1012, %v1100
        %v1102 = vpop.f32.mrf.mxu0
        %v1103 = vadd.f32 %v1014, %v1102
        %1104 = vmatmul.bf16.gmra.mxu0 %v564
        %v1105 = vpop.f32.mrf.mxu0
        %v1106 = vadd.f32 %v1017, %v1105
        %v1107 = vpop.f32.mrf.mxu0
        %v1108 = vadd.f32 %v1019, %v1107
        %1109 = vmatmul.bf16.gmra.mxu0 %v566
        %v1110 = vpop.f32.mrf.mxu0
        %v1111 = vadd.f32 %v1022, %v1110
        %v1112 = vpop.f32.mrf.mxu0
        %v1113 = vadd.f32 %v1024, %v1112
        %1114 = vdwg.mxu0
        %v1115 = vadd.f32 %v311, %v858
        %v1116 = vadd.f32 %v312, %v1036
        %v1117 = vadd.f32 %v313, %v860
        %v1118 = vadd.f32 %v314, %v1038
        %v1119 = vadd.f32 %v315, %v863
        %v1120 = vadd.f32 %v316, %v1041
        %v1121 = vadd.f32 %v317, %v865
        %v1122 = vadd.f32 %v318, %v1043
        %v1123 = vadd.f32 %v319, %v868
        %v1124 = vadd.f32 %v320, %v1046
        %v1125 = vadd.f32 %v321, %v870
        %v1126 = vadd.f32 %v322, %v1048
        %v1127 = vadd.f32 %v323, %v873
        %v1128 = vadd.f32 %v324, %v1051
        %v1129 = vadd.f32 %v325, %v875
        %v1130 = vadd.f32 %v326, %v1053
        %v1131 = vadd.f32 %v327, %v878
        %v1132 = vadd.f32 %v328, %v1056
        %v1133 = vadd.f32 %v329, %v880
        %v1134 = vadd.f32 %v330, %v1058
        %v1135 = vadd.f32 %v331, %v883
        %v1136 = vadd.f32 %v332, %v1061
        %v1137 = vadd.f32 %v333, %v885
        %v1138 = vadd.f32 %v334, %v1063
        %v1139 = vadd.f32 %v335, %v888
        %v1140 = vadd.f32 %v336, %v1066
        %v1141 = vadd.f32 %v337, %v890
        %v1142 = vadd.f32 %v338, %v1068
        %v1143 = vadd.f32 %v339, %v893
        %v1144 = vadd.f32 %v340, %v1071
        %v1145 = vadd.f32 %v341, %v895
        %v1146 = vadd.f32 %v342, %v1073
        %v1147 = vadd.f32 %v343, %v898
        %v1148 = vadd.f32 %v344, %v1076
        %v1149 = vadd.f32 %v345, %v900
        %v1150 = vadd.f32 %v346, %v1078
        %v1151 = vadd.f32 %v347, %v903
        %v1152 = vadd.f32 %v348, %v1081
        %v1153 = vadd.f32 %v349, %v905
        %v1154 = vadd.f32 %v350, %v1083
        %v1155 = vadd.f32 %v351, %v908
        %v1156 = vadd.f32 %v352, %v1086
        %v1157 = vadd.f32 %v353, %v910
        %v1158 = vadd.f32 %v354, %v1088
        %v1159 = vadd.f32 %v355, %v913
        %v1160 = vadd.f32 %v356, %v1091
        %v1161 = vadd.f32 %v357, %v915
        %v1162 = vadd.f32 %v358, %v1093
        %v1163 = vadd.f32 %v359, %v918
        %v1164 = vadd.f32 %v360, %v1096
        %v1165 = vadd.f32 %v361, %v920
        %v1166 = vadd.f32 %v362, %v1098
        %v1167 = vadd.f32 %v363, %v923
        %v1168 = vadd.f32 %v364, %v1101
        %v1169 = vadd.f32 %v365, %v925
        %v1170 = vadd.f32 %v366, %v1103
        %v1171 = vadd.f32 %v367, %v928
        %v1172 = vadd.f32 %v368, %v1106
        %v1173 = vadd.f32 %v369, %v930
        %v1174 = vadd.f32 %v370, %v1108
        %v1175 = vadd.f32 %v371, %v933
        %v1176 = vadd.f32 %v372, %v1111
        %v1177 = vadd.f32 %v373, %v935
        %v1178 = vadd.f32 %v374, %v1113
        %1179 = vst [vmem:[#allocation2] sm:$0xff] %v1115
        %1180 = vst [vmem:[#allocation2 + $0x8] sm:$0xff] %v1116
        %1181 = vst [vmem:[#allocation2 + $0x10] sm:$0xff] %v1117
        %1182 = vst [vmem:[#allocation2 + $0x18] sm:$0xff] %v1118
        %1183 = vst [vmem:[#allocation2 + $0x20] sm:$0xff] %v1119
        %1184 = vst [vmem:[#allocation2 + $0x28] sm:$0xff] %v1120
        %1185 = vst [vmem:[#allocation2 + $0x30] sm:$0xff] %v1121
        %1186 = vst [vmem:[#allocation2 + $0x38] sm:$0xff] %v1122
        %1187 = vst [vmem:[#allocation2 + $0x40] sm:$0xff] %v1123
        %1188 = vst [vmem:[#allocation2 + $0x48] sm:$0xff] %v1124
        %1189 = vst [vmem:[#allocation2 + $0x50] sm:$0xff] %v1125
        %1190 = vst [vmem:[#allocation2 + $0x58] sm:$0xff] %v1126
        %1191 = vst [vmem:[#allocation2 + $0x60] sm:$0xff] %v1127
        %1192 = vst [vmem:[#allocation2 + $0x68] sm:$0xff] %v1128
        %1193 = vst [vmem:[#allocation2 + $0x70] sm:$0xff] %v1129
        %1194 = vst [vmem:[#allocation2 + $0x78] sm:$0xff] %v1130
        %1195 = vst [vmem:[#allocation2 + $0x80] sm:$0xff] %v1131
        %1196 = vst [vmem:[#allocation2 + $0x88] sm:$0xff] %v1132
        %1197 = vst [vmem:[#allocation2 + $0x90] sm:$0xff] %v1133
        %1198 = vst [vmem:[#allocation2 + $0x98] sm:$0xff] %v1134
        %1199 = vst [vmem:[#allocation2 + $0xa0] sm:$0xff] %v1135
        %1200 = vst [vmem:[#allocation2 + $0xa8] sm:$0xff] %v1136
        %1201 = vst [vmem:[#allocation2 + $0xb0] sm:$0xff] %v1137
        %1202 = vst [vmem:[#allocation2 + $0xb8] sm:$0xff] %v1138
        %1203 = vst [vmem:[#allocation2 + $0xc0] sm:$0xff] %v1139
        %1204 = vst [vmem:[#allocation2 + $0xc8] sm:$0xff] %v1140
        %1205 = vst [vmem:[#allocation2 + $0xd0] sm:$0xff] %v1141
        %1206 = vst [vmem:[#allocation2 + $0xd8] sm:$0xff] %v1142
        %1207 = vst [vmem:[#allocation2 + $0xe0] sm:$0xff] %v1143
        %1208 = vst [vmem:[#allocation2 + $0xe8] sm:$0xff] %v1144
        %1209 = vst [vmem:[#allocation2 + $0xf0] sm:$0xff] %v1145
        %1210 = vst [vmem:[#allocation2 + $0xf8] sm:$0xff] %v1146
        %1211 = vst [vmem:[#allocation2 + $0x100] sm:$0xff] %v1147
        %1212 = vst [vmem:[#allocation2 + $0x108] sm:$0xff] %v1148
        %1213 = vst [vmem:[#allocation2 + $0x110] sm:$0xff] %v1149
        %1214 = vst [vmem:[#allocation2 + $0x118] sm:$0xff] %v1150
        %1215 = vst [vmem:[#allocation2 + $0x120] sm:$0xff] %v1151
        %1216 = vst [vmem:[#allocation2 + $0x128] sm:$0xff] %v1152
        %1217 = vst [vmem:[#allocation2 + $0x130] sm:$0xff] %v1153
        %1218 = vst [vmem:[#allocation2 + $0x138] sm:$0xff] %v1154
        %1219 = vst [vmem:[#allocation2 + $0x140] sm:$0xff] %v1155
        %1220 = vst [vmem:[#allocation2 + $0x148] sm:$0xff] %v1156
        %1221 = vst [vmem:[#allocation2 + $0x150] sm:$0xff] %v1157
        %1222 = vst [vmem:[#allocation2 + $0x158] sm:$0xff] %v1158
        %1223 = vst [vmem:[#allocation2 + $0x160] sm:$0xff] %v1159
        %1224 = vst [vmem:[#allocation2 + $0x168] sm:$0xff] %v1160
        %1225 = vst [vmem:[#allocation2 + $0x170] sm:$0xff] %v1161
        %1226 = vst [vmem:[#allocation2 + $0x178] sm:$0xff] %v1162
        %1227 = vst [vmem:[#allocation2 + $0x180] sm:$0xff] %v1163
        %1228 = vst [vmem:[#allocation2 + $0x188] sm:$0xff] %v1164
        %1229 = vst [vmem:[#allocation2 + $0x190] sm:$0xff] %v1165
        %1230 = vst [vmem:[#allocation2 + $0x198] sm:$0xff] %v1166
        %1231 = vst [vmem:[#allocation2 + $0x1a0] sm:$0xff] %v1167
        %1232 = vst [vmem:[#allocation2 + $0x1a8] sm:$0xff] %v1168
        %1233 = vst [vmem:[#allocation2 + $0x1b0] sm:$0xff] %v1169
        %1234 = vst [vmem:[#allocation2 + $0x1b8] sm:$0xff] %v1170
        %1235 = vst [vmem:[#allocation2 + $0x1c0] sm:$0xff] %v1171
        %1236 = vst [vmem:[#allocation2 + $0x1c8] sm:$0xff] %v1172
        %1237 = vst [vmem:[#allocation2 + $0x1d0] sm:$0xff] %v1173
        %1238 = vst [vmem:[#allocation2 + $0x1d8] sm:$0xff] %v1174
        %1239 = vst [vmem:[#allocation2 + $0x1e0] sm:$0xff] %v1175
        %1240 = vst [vmem:[#allocation2 + $0x1e8] sm:$0xff] %v1176
        %1241 = vst [vmem:[#allocation2 + $0x1f0] sm:$0xff] %v1177
        %1242 = vst [vmem:[#allocation2 + $0x1f8] sm:$0xff] %v1178
        // Predicated region
        $region41: #{tpu_custom_call.1} parent=27 // pred_check
          %p1243 = pneg %p243
        $region42: #{tpu_custom_call.1} parent=27 // pred_check_branch
          %1245 = sbr.rel (%p1243) target = $region44
        $region43: #{tpu_custom_call.1} parent=27 // pred_region
          %v1246 = vld [vmem:[#allocation2] sm:$0xff]
          %v1247 = vld [vmem:[#allocation2 + $0x8] sm:$0xff]
          %v1248 = vld [vmem:[#allocation2 + $0x10] sm:$0xff]
          %v1249 = vld [vmem:[#allocation2 + $0x18] sm:$0xff]
          %v1250 = vld [vmem:[#allocation2 + $0x20] sm:$0xff]
          %v1251 = vld [vmem:[#allocation2 + $0x28] sm:$0xff]
          %v1252 = vld [vmem:[#allocation2 + $0x30] sm:$0xff]
          %v1253 = vld [vmem:[#allocation2 + $0x38] sm:$0xff]
          %v1254 = vld [vmem:[#allocation2 + $0x40] sm:$0xff]
          %v1255 = vld [vmem:[#allocation2 + $0x48] sm:$0xff]
          %v1256 = vld [vmem:[#allocation2 + $0x50] sm:$0xff]
          %v1257 = vld [vmem:[#allocation2 + $0x58] sm:$0xff]
          %v1258 = vld [vmem:[#allocation2 + $0x60] sm:$0xff]
          %v1259 = vld [vmem:[#allocation2 + $0x68] sm:$0xff]
          %v1260 = vld [vmem:[#allocation2 + $0x70] sm:$0xff]
          %v1261 = vld [vmem:[#allocation2 + $0x78] sm:$0xff]
          %v1262 = vld [vmem:[#allocation2 + $0x80] sm:$0xff]
          %v1263 = vld [vmem:[#allocation2 + $0x88] sm:$0xff]
          %v1264 = vld [vmem:[#allocation2 + $0x90] sm:$0xff]
          %v1265 = vld [vmem:[#allocation2 + $0x98] sm:$0xff]
          %v1266 = vld [vmem:[#allocation2 + $0xa0] sm:$0xff]
          %v1267 = vld [vmem:[#allocation2 + $0xa8] sm:$0xff]
          %v1268 = vld [vmem:[#allocation2 + $0xb0] sm:$0xff]
          %v1269 = vld [vmem:[#allocation2 + $0xb8] sm:$0xff]
          %v1270 = vld [vmem:[#allocation2 + $0xc0] sm:$0xff]
          %v1271 = vld [vmem:[#allocation2 + $0xc8] sm:$0xff]
          %v1272 = vld [vmem:[#allocation2 + $0xd0] sm:$0xff]
          %v1273 = vld [vmem:[#allocation2 + $0xd8] sm:$0xff]
          %v1274 = vld [vmem:[#allocation2 + $0xe0] sm:$0xff]
          %v1275 = vld [vmem:[#allocation2 + $0xe8] sm:$0xff]
          %v1276 = vld [vmem:[#allocation2 + $0xf0] sm:$0xff]
          %v1277 = vld [vmem:[#allocation2 + $0xf8] sm:$0xff]
          %v1278 = vld [vmem:[#allocation2 + $0x100] sm:$0xff]
          %v1279 = vld [vmem:[#allocation2 + $0x108] sm:$0xff]
          %v1280 = vld [vmem:[#allocation2 + $0x110] sm:$0xff]
          %v1281 = vld [vmem:[#allocation2 + $0x118] sm:$0xff]
          %v1282 = vld [vmem:[#allocation2 + $0x120] sm:$0xff]
          %v1283 = vld [vmem:[#allocation2 + $0x128] sm:$0xff]
          %v1284 = vld [vmem:[#allocation2 + $0x130] sm:$0xff]
          %v1285 = vld [vmem:[#allocation2 + $0x138] sm:$0xff]
          %v1286 = vld [vmem:[#allocation2 + $0x140] sm:$0xff]
          %v1287 = vld [vmem:[#allocation2 + $0x148] sm:$0xff]
          %v1288 = vld [vmem:[#allocation2 + $0x150] sm:$0xff]
          %v1289 = vld [vmem:[#allocation2 + $0x158] sm:$0xff]
          %v1290 = vld [vmem:[#allocation2 + $0x160] sm:$0xff]
          %v1291 = vld [vmem:[#allocation2 + $0x168] sm:$0xff]
          %v1292 = vld [vmem:[#allocation2 + $0x170] sm:$0xff]
          %v1293 = vld [vmem:[#allocation2 + $0x178] sm:$0xff]
          %v1294 = vld [vmem:[#allocation2 + $0x180] sm:$0xff]
          %v1295 = vld [vmem:[#allocation2 + $0x188] sm:$0xff]
          %v1296 = vld [vmem:[#allocation2 + $0x190] sm:$0xff]
          %v1297 = vld [vmem:[#allocation2 + $0x198] sm:$0xff]
          %v1298 = vld [vmem:[#allocation2 + $0x1a0] sm:$0xff]
          %v1299 = vld [vmem:[#allocation2 + $0x1a8] sm:$0xff]
          %v1300 = vld [vmem:[#allocation2 + $0x1b0] sm:$0xff]
          %v1301 = vld [vmem:[#allocation2 + $0x1b8] sm:$0xff]
          %v1302 = vld [vmem:[#allocation2 + $0x1c0] sm:$0xff]
          %v1303 = vld [vmem:[#allocation2 + $0x1c8] sm:$0xff]
          %v1304 = vld [vmem:[#allocation2 + $0x1d0] sm:$0xff]
          %v1305 = vld [vmem:[#allocation2 + $0x1d8] sm:$0xff]
          %v1306 = vld [vmem:[#allocation2 + $0x1e0] sm:$0xff]
          %v1307 = vld [vmem:[#allocation2 + $0x1e8] sm:$0xff]
          %v1308 = vld [vmem:[#allocation2 + $0x1f0] sm:$0xff]
          %v1309 = vld [vmem:[#allocation2 + $0x1f8] sm:$0xff]
          %v1310 = vpack.c.bf16 %v1247, %v1246
          %v1311 = vpack.c.bf16 %v1249, %v1248
          %v1312 = vpack.c.bf16 %v1251, %v1250
          %v1313 = vpack.c.bf16 %v1253, %v1252
          %v1314 = vpack.c.bf16 %v1255, %v1254
          %v1315 = vpack.c.bf16 %v1257, %v1256
          %v1316 = vpack.c.bf16 %v1259, %v1258
          %v1317 = vpack.c.bf16 %v1261, %v1260
          %v1318 = vpack.c.bf16 %v1263, %v1262
          %v1319 = vpack.c.bf16 %v1265, %v1264
          %v1320 = vpack.c.bf16 %v1267, %v1266
          %v1321 = vpack.c.bf16 %v1269, %v1268
          %v1322 = vpack.c.bf16 %v1271, %v1270
          %v1323 = vpack.c.bf16 %v1273, %v1272
          %v1324 = vpack.c.bf16 %v1275, %v1274
          %v1325 = vpack.c.bf16 %v1277, %v1276
          %v1326 = vpack.c.bf16 %v1279, %v1278
          %v1327 = vpack.c.bf16 %v1281, %v1280
          %v1328 = vpack.c.bf16 %v1283, %v1282
          %v1329 = vpack.c.bf16 %v1285, %v1284
          %v1330 = vpack.c.bf16 %v1287, %v1286
          %v1331 = vpack.c.bf16 %v1289, %v1288
          %v1332 = vpack.c.bf16 %v1291, %v1290
          %v1333 = vpack.c.bf16 %v1293, %v1292
          %v1334 = vpack.c.bf16 %v1295, %v1294
          %v1335 = vpack.c.bf16 %v1297, %v1296
          %v1336 = vpack.c.bf16 %v1299, %v1298
          %v1337 = vpack.c.bf16 %v1301, %v1300
          %v1338 = vpack.c.bf16 %v1303, %v1302
          %v1339 = vpack.c.bf16 %v1305, %v1304
          %v1340 = vpack.c.bf16 %v1307, %v1306
          %v1341 = vpack.c.bf16 %v1309, %v1308
          %1342 = vst [vmem:[%s236] sm:$0xff] %v1310
          %1343 = vst [vmem:[%s236 + $0x8] sm:$0xff] %v1311
          %1344 = vst [vmem:[%s236 + $0x10] sm:$0xff] %v1312
          %1345 = vst [vmem:[%s236 + $0x18] sm:$0xff] %v1313
          %1346 = vst [vmem:[%s236 + $0x20] sm:$0xff] %v1314
          %1347 = vst [vmem:[%s236 + $0x28] sm:$0xff] %v1315
          %1348 = vst [vmem:[%s236 + $0x30] sm:$0xff] %v1316
          %1349 = vst [vmem:[%s236 + $0x38] sm:$0xff] %v1317
          %1350 = vst [vmem:[%s236 + $0x40] sm:$0xff] %v1318
          %1351 = vst [vmem:[%s236 + $0x48] sm:$0xff] %v1319
          %1352 = vst [vmem:[%s236 + $0x50] sm:$0xff] %v1320
          %1353 = vst [vmem:[%s236 + $0x58] sm:$0xff] %v1321
          %1354 = vst [vmem:[%s236 + $0x60] sm:$0xff] %v1322
          %1355 = vst [vmem:[%s236 + $0x68] sm:$0xff] %v1323
          %1356 = vst [vmem:[%s236 + $0x70] sm:$0xff] %v1324
          %1357 = vst [vmem:[%s236 + $0x78] sm:$0xff] %v1325
          %1358 = vst [vmem:[%s236 + $0x80] sm:$0xff] %v1326
          %1359 = vst [vmem:[%s236 + $0x88] sm:$0xff] %v1327
          %1360 = vst [vmem:[%s236 + $0x90] sm:$0xff] %v1328
          %1361 = vst [vmem:[%s236 + $0x98] sm:$0xff] %v1329
          %1362 = vst [vmem:[%s236 + $0xa0] sm:$0xff] %v1330
          %1363 = vst [vmem:[%s236 + $0xa8] sm:$0xff] %v1331
          %1364 = vst [vmem:[%s236 + $0xb0] sm:$0xff] %v1332
          %1365 = vst [vmem:[%s236 + $0xb8] sm:$0xff] %v1333
          %1366 = vst [vmem:[%s236 + $0xc0] sm:$0xff] %v1334
          %1367 = vst [vmem:[%s236 + $0xc8] sm:$0xff] %v1335
          %1368 = vst [vmem:[%s236 + $0xd0] sm:$0xff] %v1336
          %1369 = vst [vmem:[%s236 + $0xd8] sm:$0xff] %v1337
          %1370 = vst [vmem:[%s236 + $0xe0] sm:$0xff] %v1338
          %1371 = vst [vmem:[%s236 + $0xe8] sm:$0xff] %v1339
          %1372 = vst [vmem:[%s236 + $0xf0] sm:$0xff] %v1340
          %1373 = vst [vmem:[%s236 + $0xf8] sm:$0xff] %v1341
        $region44: #{tpu_custom_call.1} parent=27 // pred_fallthru
          _
        %s1374 = sand.u32 %s107, 1
        %s1375 = scalar_lea.sflag [#allocation5], %s1374
        %s1376 = sand.u32 %s107, 1
        %s1377 = smul.addr %s1376, 256
        %s1378 = scalar_lea.vmem [#allocation8], %s1377
        // Predicated region
        $region45: #{tpu_custom_call.1} parent=27 // pred_check
          %p1379 = pneg %p117
        $region46: #{tpu_custom_call.1} parent=27 // pred_check_branch
          %1381 = sbr.rel (%p1379) target = $region48
        $region47: #{tpu_custom_call.1} parent=27 // pred_region
          %s1382 = smul.u32 32, %s27
          %s1383 = smul.u32 2, %s28
          %1385 = vsyncadd %s1375, 0
          %s1386 = smul.addr %s1382, 6
          %s1387 = sadd.s32 %s1383, %s1386
          %s1388 = smul.addr %s1387, 4
          %s1389 = scalar_lea.hbm %s2, %s1388
          %s1390 = sshll.u32 %s1378, 4
          %s1391 = int_to_ptr.vmem [resolvable:$true] %s1390
          %s1392 = sshll.u32 %s1389, 4
          %s1393 = int_to_ptr.hbm [resolvable:$true] %s1392
          %1398 = dma.vmem_to_hbm [thread:$0]  %s1391, 4096, %s1393, %s1375, 128, 384, 8
        $region48: #{tpu_custom_call.1} parent=27 // pred_fallthru
          _
      $region28: #{tpu_custom_call.1} parent=5 // pred_fallthru
        _
      %p1399 = scmp.le.s32.totalorder 2, %s17
      // Predicated region
      $region49: #{tpu_custom_call.1} parent=5 // pred_check
        %p1400 = pneg %p1399
      $region50: #{tpu_custom_call.1} parent=5 // pred_check_branch
        %1402 = sbr.rel (%p1400) target = $region52
      $region51: #{tpu_custom_call.1} parent=5 // pred_region
        %s1403 = ssub.s32 %s17, 2
        // Predicated region
        $region53: #{tpu_custom_call.1} parent=51 // pred_check
          %p1404 = pneg %p123
        $region54: #{tpu_custom_call.1} parent=51 // pred_check_branch
          %1406 = sbr.rel (%p1404) target = $region56
        $region55: #{tpu_custom_call.1} parent=51 // pred_region
          %s1407 = sand.u32 %s108, 1
          %s1408 = scalar_lea.sflag [#allocation5], %s1407
          %s1409 = sand.u32 %s108, 1
          %s1410 = smul.addr %s1409, 256
          %s1411 = scalar_lea.vmem [#allocation8], %s1410
          %1413 = dma.done %s1408, 4096
        $region56: #{tpu_custom_call.1} parent=51 // pred_fallthru
          _
      $region52: #{tpu_custom_call.1} parent=5 // pred_fallthru
        _
    $region6: #{tpu_custom_call.1} parent=1 // loop_footer
      %s21 = sadd.s32 1, %s17
    $region7: #{tpu_custom_call.1} parent=1 // loop_footer_branch
      %16 = sbr.rel target = $region3
    $region8: #{tpu_custom_call.1} parent=1 // loop_exit
      _
    %1414 = vsyncpa [#allocation4], 1
    %s1415 = scalar_lea.sflag [#allocation4], 1
    %1416 = vsyncpa %s1415, 1
    %1417 = vsyncpa [#allocation7], 1
    %s1418 = scalar_lea.sflag [#allocation7], 1
    %1419 = vsyncpa %s1418, 1
    %1420 = vsyncpa [#allocation5], 1
    %s1421 = scalar_lea.sflag [#allocation5], 1
    %1422 = vsyncpa %s1421, 1

</llo_original>
